<compile_context>
chip_gen: v7x
topology: tpu7x:2x2x1
jax: 0.10.0
libtpu: 0.0.40
codegen_flags: <defaults>
</compile_context>

<pallas_src>
import functools

import jax
import jax.numpy as jnp
from jax import lax
from jax.experimental import pallas as pl
from jax.experimental.pallas import tpu as pltpu


def _round_up(n, m):
    return ((n + m - 1) // m) * m


# ----------------------------------------------------------------------------
# Fused kernel: conv1(3x3)+ReLU on the 9 patches feeding conv2's center pixel,
# conv2 center pixel via 9 accumulating tap matmuls + ReLU, fused fc1|fc2|fc3
# matmul + stable sigmoid.  All matmuls are bf16 x bf16 -> f32 on the MXU.
# ----------------------------------------------------------------------------
def _fused_kernel(p1_ref, w1_ref, w2_ref, wfc_ref, out_ref, *, C, B_blk, C_pad):
    # Lane C carries the folded biases ("ones" lane); lanes >= C are padding.
    bias_lane = lax.broadcasted_iota(jnp.int32, (B_blk, C_pad), 1) == C

    w1 = w1_ref[...]                                   # (K1, C_pad) bf16, b1 folded
    acc = jnp.zeros((B_blk, C_pad), jnp.float32)       # conv2 center accumulator
    for p in range(9):                                 # unrolled, 9 tap positions
        # conv1 output at patch position p (MXU, f32 accumulate) + ReLU.
        h1p = jnp.dot(p1_ref[p], w1, preferred_element_type=jnp.float32)
        # Inject the ones lane so conv2's bias rides in w2 tap 0 row C.
        h1p = jnp.where(bias_lane, 1.0, jnp.maximum(h1p, 0.0)).astype(jnp.bfloat16)
        # conv2 tap p: accumulating MXU dot against the (C_pad, C_pad) tap matrix.
        acc += jnp.dot(h1p, w2_ref[p], preferred_element_type=jnp.float32)

    # conv2 + ReLU at the center pixel; ones lane again for the fc biases.
    center = jnp.where(bias_lane, 1.0, jnp.maximum(acc, 0.0)).astype(jnp.bfloat16)

    # fc1 | fc2 | fc3 fused into one (C_pad, 3*C_pad) matmul.
    z = jnp.dot(center, wfc_ref[...], preferred_element_type=jnp.float32)

    # Numerically stable sigmoid with a single reciprocal (VPU/EUP, f32).
    ez = jnp.exp(-jnp.abs(z))
    inv = 1.0 / (1.0 + ez)
    out_ref[...] = jnp.where(z >= 0.0, inv, ez * inv)


# ----------------------------------------------------------------------------
# One-time repack of PyTorch-layout weights into padded, bias-folded, bf16,
# matmul-ready matrices.
# ----------------------------------------------------------------------------
def pack_params(params, *, lane=128):
    C = params["conv1_b"].shape[0]
    C_pad = _round_up(C + 1, lane)        # +1 spare lane for the folded biases
    K1 = _round_up(9 * C + 1, lane)       # im2col contraction + ones column

    # conv1: OIHW -> (9C, C) with row (dy*3+dx)*C + ci, col co; bias at row 9C.
    w1 = jnp.zeros((K1, C_pad), jnp.float32)
    w1 = w1.at[:9 * C, :C].set(
        jnp.transpose(params["conv1_w"], (2, 3, 1, 0)).reshape(9 * C, C))
    w1 = w1.at[9 * C, :C].set(params["conv1_b"])

    # conv2: nine (C_pad, C_pad) tap matrices, tap p = dy*3+dx; bias folded
    # into tap 0 row C (matched by the kernel's ones lane).
    w2 = jnp.zeros((9, C_pad, C_pad), jnp.float32)
    w2 = w2.at[:, :C, :C].set(
        jnp.transpose(params["conv2_w"], (2, 3, 1, 0)).reshape(9, C, C))
    w2 = w2.at[0, C, :C].set(params["conv2_b"])

    # fc1/fc2/fc3 fused into one (C_pad, 3*C_pad) matrix; biases in row C.
    wfc = jnp.zeros((C_pad, 3 * C_pad), jnp.float32)
    for j, name in enumerate(("fc1", "fc2", "fc3")):
        wfc = wfc.at[:C, j * C_pad:j * C_pad + C].set(params[f"{name}_w"].T)
        wfc = wfc.at[C, j * C_pad:j * C_pad + C].set(params[f"{name}_b"])

    return {"w1": w1.astype(jnp.bfloat16),
            "w2": w2.astype(jnp.bfloat16),
            "wfc": wfc.astype(jnp.bfloat16)}


# ----------------------------------------------------------------------------
# Wrapper: 5x5 center-receptive-field window, im2col to a lane-dense padded
# patches slab (layout plumbing only), then one batch-parallel pallas_call.
# ----------------------------------------------------------------------------
def attention_module_w(x, x_ed, x_noisy, packed):
    B, C, H, W = x.shape
    K1, C_pad = packed["w1"].shape

    # Only the 5x5 receptive field of conv2's center output pixel matters.
    r0, c0 = (H - 4) // 2, (W - 4) // 2
    win = lambda a: a[:, :, r0:r0 + 5, c0:c0 + 5]
    xs = win(x) + win(x_ed) + win(x_noisy)               # (B, C, 5, 5)
    xs = jnp.transpose(xs, (0, 2, 3, 1))                 # (B, 5, 5, C)

    # Batch padding: multiple of 16 (native bf16 sublane tile), then to B_blk.
    B_pad = _round_up(B, 16)
    B_blk = min(B_pad, 128)
    B_pad = _round_up(B_pad, B_blk)

    # im2col in the wrapper (XLA): patch p = i*3+j holds window[i:i+3, j:j+3]
    # flattened as column (dy*3+dx)*C + ci, plus a ones column (bias fold).
    pat = jnp.stack([xs[:, i:i + 3, j:j + 3, :].reshape(B, 9 * C)
                     for i in range(3) for j in range(3)], axis=0)   # (9, B, 9C)
    pat = jnp.concatenate([pat, jnp.ones((9, B, 1), pat.dtype)], axis=-1)
    pat = jnp.pad(pat, ((0, 0), (0, B_pad - B), (0, K1 - 9 * C - 1)))
    pat = pat.astype(jnp.bfloat16)                        # (9, B_pad, K1)

    out = pl.pallas_call(
        functools.partial(_fused_kernel, C=C, B_blk=B_blk, C_pad=C_pad),
        out_shape=jax.ShapeDtypeStruct((B_pad, 3 * C_pad), jnp.float32),
        grid=(B_pad // B_blk,),
        in_specs=[
            pl.BlockSpec((9, B_blk, K1), lambda i: (0, i, 0)),
            pl.BlockSpec((K1, C_pad), lambda i: (0, 0)),
            pl.BlockSpec((9, C_pad, C_pad), lambda i: (0, 0, 0)),
            pl.BlockSpec((C_pad, 3 * C_pad), lambda i: (0, 0)),
        ],
        out_specs=pl.BlockSpec((B_blk, 3 * C_pad), lambda i: (i, 0)),
        compiler_params=pltpu.CompilerParams(
            dimension_semantics=("parallel",)),
        # TODO(synk): at production B*C, also set vmem_limit_bytes and shrink
        # B_blk so the double-buffered patches block stays inside VMEM.
    )(pat, packed["w1"], packed["w2"], packed["wfc"])

    # permute(0,3,1,2) of (B,1,1,C) == reshape to (B, C, 1, 1); drop padding.
    a1 = out[:B, 0 * C_pad:0 * C_pad + C].reshape(B, C, 1, 1)
    a2 = out[:B, 1 * C_pad:1 * C_pad + C].reshape(B, C, 1, 1)
    a3 = out[:B, 2 * C_pad:2 * C_pad + C].reshape(B, C, 1, 1)
    return a1, a2, a3


# ----------------------------------------------------------------------------
# Deterministic parameter init (shapes follow nn.Conv2d / nn.Linear).
# ----------------------------------------------------------------------------
def init_params(key, C):
    ks = jax.random.split(key, 10)
    n = lambda k, shape, s=0.1: (s * jax.random.normal(k, shape)).astype(jnp.float32)
    return {
        "conv1_w": n(ks[0], (C, C, 3, 3)), "conv1_b": n(ks[1], (C,)),
        "conv2_w": n(ks[2], (C, C, 3, 3)), "conv2_b": n(ks[3], (C,)),
        "fc1_w": n(ks[4], (C, C)), "fc1_b": n(ks[5], (C,)),
        "fc2_w": n(ks[6], (C, C)), "fc2_b": n(ks[7], (C,)),
        "fc3_w": n(ks[8], (C, C)), "fc3_b": n(ks[9], (C,)),
    }


# ----------------------------------------------------------------------------
# Pure-JAX reference of the PyTorch forward (f32, for validation).
# ----------------------------------------------------------------------------
def reference(x, x_ed, x_noisy, params):
    xs = x + x_ed + x_noisy
    dn = ("NCHW", "OIHW", "NCHW")
    h1 = jnp.maximum(
        lax.conv_general_dilated(xs, params["conv1_w"], (1, 1), "VALID",
                                 dimension_numbers=dn)
        + params["conv1_b"][None, :, None, None], 0.0)
    h2 = jnp.maximum(
        lax.conv_general_dilated(h1, params["conv2_w"], (1, 1), "VALID",
                                 dimension_numbers=dn)
        + params["conv2_b"][None, :, None, None], 0.0)
    c = h2[:, :, h2.shape[2] // 2, h2.shape[3] // 2]   # (B, C)

    def fc(w, b):
        return jax.nn.sigmoid(c @ w.T + b).reshape(c.shape[0], c.shape[1], 1, 1)

    return (fc(params["fc1_w"], params["fc1_b"]),
            fc(params["fc2_w"], params["fc2_b"]),
            fc(params["fc3_w"], params["fc3_b"]))


if __name__ == "__main__":
    key = jax.random.PRNGKey(0)
    B, C, H, W = 2, 4, 16, 16
    kx, ke, kn, kp = jax.random.split(key, 4)
    x = jax.random.normal(kx, (B, C, H, W), jnp.float32)
    x_ed = jax.random.normal(ke, (B, C, H, W), jnp.float32)
    x_noisy = jax.random.normal(kn, (B, C, H, W), jnp.float32)
    params = init_params(kp, C)
    packed = pack_params(params)

    fwd = jax.jit(attention_module_w)
    a1, a2, a3 = fwd(x, x_ed, x_noisy, packed)
    jax.block_until_ready((a1, a2, a3))

    r1, r2, r3 = reference(x, x_ed, x_noisy, params)
    # bf16 MXU operands (f32 accumulate) -> slightly looser tolerance than the
    # pure-f32 reference; sigmoid outputs live in [0, 1] so 1e-2 is ample.
    for got, want in ((a1, r1), (a2, r2), (a3, r3)):
        assert got.shape == (B, C, 1, 1), got.shape
        assert jnp.allclose(got, want, rtol=1e-2, atol=1e-2), \
            float(jnp.max(jnp.abs(got - want)))

    print("KERNEL_OK")
</pallas_src>

<mosaic_0001>
module attributes {stable_mosaic.version = 11 : i64} {
  func.func @_fused_kernel(%arg0: i32, %arg1: memref<9x16x128xbf16, #tpu.memory_space<vmem>>, %arg2: memref<128x128xbf16, #tpu.memory_space<vmem>>, %arg3: memref<9x128x128xbf16, #tpu.memory_space<vmem>>, %arg4: memref<128x384xbf16, #tpu.memory_space<vmem>>, %arg5: memref<16x384xf32, #tpu.memory_space<vmem>>) attributes {dimension_semantics = [#tpu.dimension_semantics<parallel>], iteration_bounds = array<i64: 1>, scalar_prefetch = 0 : i64, scratch_operands = 0 : i64, tpu.core_type = #tpu.core_type<tc>, window_params = [{transform_indices = @transform_0, window_bounds = array<i64: 9, 16, 128>}, {pipeline_mode = #tpu.pipeline_mode<synchronous>, transform_indices = @transform_1, window_bounds = array<i64: 128, 128>}, {pipeline_mode = #tpu.pipeline_mode<synchronous>, transform_indices = @transform_2, window_bounds = array<i64: 9, 128, 128>}, {pipeline_mode = #tpu.pipeline_mode<synchronous>, transform_indices = @transform_3, window_bounds = array<i64: 128, 384>}, {transform_indices = @transform_4, window_bounds = array<i64: 16, 384>}]} {
    %0 = tpu.iota {dimensions = array<i32: 1>} : vector<16x128xi32>
    %c4_i32 = arith.constant 4 : i32
    %1 = vector.broadcast %c4_i32 : i32 to vector<16x128xi32>
    %2 = arith.cmpi eq, %0, %1 : vector<16x128xi32>
    %c0 = arith.constant 0 : index
    %c0_0 = arith.constant 0 : index
    %3 = vector.load %arg2[%c0, %c0_0] : memref<128x128xbf16, #tpu.memory_space<vmem>>, vector<128x128xbf16>
    %cst = arith.constant 0.000000e+00 : f32
    %4 = vector.broadcast %cst : f32 to vector<16x128xf32>
    %c0_1 = arith.constant 0 : index
    %c0_2 = arith.constant 0 : index
    %c0_3 = arith.constant 0 : index
    %5 = vector.load %arg1[%c0_1, %c0_2, %c0_3] : memref<9x16x128xbf16, #tpu.memory_space<vmem>>, vector<1x16x128xbf16>
    %6 = vector.shape_cast %5 : vector<1x16x128xbf16> to vector<16x128xbf16>
    %cst_4 = arith.constant dense<0.000000e+00> : vector<16x128xf32>
    %7 = tpu.matmul %6, %3, %cst_4 {dimension_numbers = #tpu.dot_dimension_numbers<[1], [0], [0], [1], [0, 0, 1, 1], [], []>} : vector<16x128xbf16>, vector<128x128xbf16>, vector<16x128xf32> -> vector<16x128xf32>
    %cst_5 = arith.constant 0.000000e+00 : f32
    %8 = vector.broadcast %cst_5 : f32 to vector<16x128xf32>
    %9 = arith.maximumf %7, %8 : vector<16x128xf32>
    %cst_6 = arith.constant 1.000000e+00 : f32
    %10 = vector.broadcast %cst_6 : f32 to vector<16x128xf32>
    %11 = arith.select %2, %10, %9 : vector<16x128xi1>, vector<16x128xf32>
    %12 = arith.truncf %11 : vector<16x128xf32> to vector<16x128xbf16>
    %c0_7 = arith.constant 0 : index
    %c0_8 = arith.constant 0 : index
    %c0_9 = arith.constant 0 : index
    %13 = vector.load %arg3[%c0_7, %c0_8, %c0_9] : memref<9x128x128xbf16, #tpu.memory_space<vmem>>, vector<1x128x128xbf16>
    %14 = vector.shape_cast %13 : vector<1x128x128xbf16> to vector<128x128xbf16>
    %cst_10 = arith.constant dense<0.000000e+00> : vector<16x128xf32>
    %15 = tpu.matmul %12, %14, %cst_10 {dimension_numbers = #tpu.dot_dimension_numbers<[1], [0], [0], [1], [0, 0, 1, 1], [], []>} : vector<16x128xbf16>, vector<128x128xbf16>, vector<16x128xf32> -> vector<16x128xf32>
    %16 = arith.addf %4, %15 : vector<16x128xf32>
    %c1 = arith.constant 1 : index
    %c0_11 = arith.constant 0 : index
    %c0_12 = arith.constant 0 : index
    %17 = vector.load %arg1[%c1, %c0_11, %c0_12] : memref<9x16x128xbf16, #tpu.memory_space<vmem>>, vector<1x16x128xbf16>
    %18 = vector.shape_cast %17 : vector<1x16x128xbf16> to vector<16x128xbf16>
    %cst_13 = arith.constant dense<0.000000e+00> : vector<16x128xf32>
    %19 = tpu.matmul %18, %3, %cst_13 {dimension_numbers = #tpu.dot_dimension_numbers<[1], [0], [0], [1], [0, 0, 1, 1], [], []>} : vector<16x128xbf16>, vector<128x128xbf16>, vector<16x128xf32> -> vector<16x128xf32>
    %cst_14 = arith.constant 0.000000e+00 : f32
    %20 = vector.broadcast %cst_14 : f32 to vector<16x128xf32>
    %21 = arith.maximumf %19, %20 : vector<16x128xf32>
    %cst_15 = arith.constant 1.000000e+00 : f32
    %22 = vector.broadcast %cst_15 : f32 to vector<16x128xf32>
    %23 = arith.select %2, %22, %21 : vector<16x128xi1>, vector<16x128xf32>
    %24 = arith.truncf %23 : vector<16x128xf32> to vector<16x128xbf16>
    %c1_16 = arith.constant 1 : index
    %c0_17 = arith.constant 0 : index
    %c0_18 = arith.constant 0 : index
    %25 = vector.load %arg3[%c1_16, %c0_17, %c0_18] : memref<9x128x128xbf16, #tpu.memory_space<vmem>>, vector<1x128x128xbf16>
    %26 = vector.shape_cast %25 : vector<1x128x128xbf16> to vector<128x128xbf16>
    %cst_19 = arith.constant dense<0.000000e+00> : vector<16x128xf32>
    %27 = tpu.matmul %24, %26, %cst_19 {dimension_numbers = #tpu.dot_dimension_numbers<[1], [0], [0], [1], [0, 0, 1, 1], [], []>} : vector<16x128xbf16>, vector<128x128xbf16>, vector<16x128xf32> -> vector<16x128xf32>
    %28 = arith.addf %16, %27 : vector<16x128xf32>
    %c2 = arith.constant 2 : index
    %c0_20 = arith.constant 0 : index
    %c0_21 = arith.constant 0 : index
    %29 = vector.load %arg1[%c2, %c0_20, %c0_21] : memref<9x16x128xbf16, #tpu.memory_space<vmem>>, vector<1x16x128xbf16>
    %30 = vector.shape_cast %29 : vector<1x16x128xbf16> to vector<16x128xbf16>
    %cst_22 = arith.constant dense<0.000000e+00> : vector<16x128xf32>
    %31 = tpu.matmul %30, %3, %cst_22 {dimension_numbers = #tpu.dot_dimension_numbers<[1], [0], [0], [1], [0, 0, 1, 1], [], []>} : vector<16x128xbf16>, vector<128x128xbf16>, vector<16x128xf32> -> vector<16x128xf32>
    %cst_23 = arith.constant 0.000000e+00 : f32
    %32 = vector.broadcast %cst_23 : f32 to vector<16x128xf32>
    %33 = arith.maximumf %31, %32 : vector<16x128xf32>
    %cst_24 = arith.constant 1.000000e+00 : f32
    %34 = vector.broadcast %cst_24 : f32 to vector<16x128xf32>
    %35 = arith.select %2, %34, %33 : vector<16x128xi1>, vector<16x128xf32>
    %36 = arith.truncf %35 : vector<16x128xf32> to vector<16x128xbf16>
    %c2_25 = arith.constant 2 : index
    %c0_26 = arith.constant 0 : index
    %c0_27 = arith.constant 0 : index
    %37 = vector.load %arg3[%c2_25, %c0_26, %c0_27] : memref<9x128x128xbf16, #tpu.memory_space<vmem>>, vector<1x128x128xbf16>
    %38 = vector.shape_cast %37 : vector<1x128x128xbf16> to vector<128x128xbf16>
    %cst_28 = arith.constant dense<0.000000e+00> : vector<16x128xf32>
    %39 = tpu.matmul %36, %38, %cst_28 {dimension_numbers = #tpu.dot_dimension_numbers<[1], [0], [0], [1], [0, 0, 1, 1], [], []>} : vector<16x128xbf16>, vector<128x128xbf16>, vector<16x128xf32> -> vector<16x128xf32>
    %40 = arith.addf %28, %39 : vector<16x128xf32>
    %c3 = arith.constant 3 : index
    %c0_29 = arith.constant 0 : index
    %c0_30 = arith.constant 0 : index
    %41 = vector.load %arg1[%c3, %c0_29, %c0_30] : memref<9x16x128xbf16, #tpu.memory_space<vmem>>, vector<1x16x128xbf16>
    %42 = vector.shape_cast %41 : vector<1x16x128xbf16> to vector<16x128xbf16>
    %cst_31 = arith.constant dense<0.000000e+00> : vector<16x128xf32>
    %43 = tpu.matmul %42, %3, %cst_31 {dimension_numbers = #tpu.dot_dimension_numbers<[1], [0], [0], [1], [0, 0, 1, 1], [], []>} : vector<16x128xbf16>, vector<128x128xbf16>, vector<16x128xf32> -> vector<16x128xf32>
    %cst_32 = arith.constant 0.000000e+00 : f32
    %44 = vector.broadcast %cst_32 : f32 to vector<16x128xf32>
    %45 = arith.maximumf %43, %44 : vector<16x128xf32>
    %cst_33 = arith.constant 1.000000e+00 : f32
    %46 = vector.broadcast %cst_33 : f32 to vector<16x128xf32>
    %47 = arith.select %2, %46, %45 : vector<16x128xi1>, vector<16x128xf32>
    %48 = arith.truncf %47 : vector<16x128xf32> to vector<16x128xbf16>
    %c3_34 = arith.constant 3 : index
    %c0_35 = arith.constant 0 : index
    %c0_36 = arith.constant 0 : index
    %49 = vector.load %arg3[%c3_34, %c0_35, %c0_36] : memref<9x128x128xbf16, #tpu.memory_space<vmem>>, vector<1x128x128xbf16>
    %50 = vector.shape_cast %49 : vector<1x128x128xbf16> to vector<128x128xbf16>
    %cst_37 = arith.constant dense<0.000000e+00> : vector<16x128xf32>
    %51 = tpu.matmul %48, %50, %cst_37 {dimension_numbers = #tpu.dot_dimension_numbers<[1], [0], [0], [1], [0, 0, 1, 1], [], []>} : vector<16x128xbf16>, vector<128x128xbf16>, vector<16x128xf32> -> vector<16x128xf32>
    %52 = arith.addf %40, %51 : vector<16x128xf32>
    %c4 = arith.constant 4 : index
    %c0_38 = arith.constant 0 : index
    %c0_39 = arith.constant 0 : index
    %53 = vector.load %arg1[%c4, %c0_38, %c0_39] : memref<9x16x128xbf16, #tpu.memory_space<vmem>>, vector<1x16x128xbf16>
    %54 = vector.shape_cast %53 : vector<1x16x128xbf16> to vector<16x128xbf16>
    %cst_40 = arith.constant dense<0.000000e+00> : vector<16x128xf32>
    %55 = tpu.matmul %54, %3, %cst_40 {dimension_numbers = #tpu.dot_dimension_numbers<[1], [0], [0], [1], [0, 0, 1, 1], [], []>} : vector<16x128xbf16>, vector<128x128xbf16>, vector<16x128xf32> -> vector<16x128xf32>
    %cst_41 = arith.constant 0.000000e+00 : f32
    %56 = vector.broadcast %cst_41 : f32 to vector<16x128xf32>
    %57 = arith.maximumf %55, %56 : vector<16x128xf32>
    %cst_42 = arith.constant 1.000000e+00 : f32
    %58 = vector.broadcast %cst_42 : f32 to vector<16x128xf32>
    %59 = arith.select %2, %58, %57 : vector<16x128xi1>, vector<16x128xf32>
    %60 = arith.truncf %59 : vector<16x128xf32> to vector<16x128xbf16>
    %c4_43 = arith.constant 4 : index
    %c0_44 = arith.constant 0 : index
    %c0_45 = arith.constant 0 : index
    %61 = vector.load %arg3[%c4_43, %c0_44, %c0_45] : memref<9x128x128xbf16, #tpu.memory_space<vmem>>, vector<1x128x128xbf16>
    %62 = vector.shape_cast %61 : vector<1x128x128xbf16> to vector<128x128xbf16>
    %cst_46 = arith.constant dense<0.000000e+00> : vector<16x128xf32>
    %63 = tpu.matmul %60, %62, %cst_46 {dimension_numbers = #tpu.dot_dimension_numbers<[1], [0], [0], [1], [0, 0, 1, 1], [], []>} : vector<16x128xbf16>, vector<128x128xbf16>, vector<16x128xf32> -> vector<16x128xf32>
    %64 = arith.addf %52, %63 : vector<16x128xf32>
    %c5 = arith.constant 5 : index
    %c0_47 = arith.constant 0 : index
    %c0_48 = arith.constant 0 : index
    %65 = vector.load %arg1[%c5, %c0_47, %c0_48] : memref<9x16x128xbf16, #tpu.memory_space<vmem>>, vector<1x16x128xbf16>
    %66 = vector.shape_cast %65 : vector<1x16x128xbf16> to vector<16x128xbf16>
    %cst_49 = arith.constant dense<0.000000e+00> : vector<16x128xf32>
    %67 = tpu.matmul %66, %3, %cst_49 {dimension_numbers = #tpu.dot_dimension_numbers<[1], [0], [0], [1], [0, 0, 1, 1], [], []>} : vector<16x128xbf16>, vector<128x128xbf16>, vector<16x128xf32> -> vector<16x128xf32>
    %cst_50 = arith.constant 0.000000e+00 : f32
    %68 = vector.broadcast %cst_50 : f32 to vector<16x128xf32>
    %69 = arith.maximumf %67, %68 : vector<16x128xf32>
    %cst_51 = arith.constant 1.000000e+00 : f32
    %70 = vector.broadcast %cst_51 : f32 to vector<16x128xf32>
    %71 = arith.select %2, %70, %69 : vector<16x128xi1>, vector<16x128xf32>
    %72 = arith.truncf %71 : vector<16x128xf32> to vector<16x128xbf16>
    %c5_52 = arith.constant 5 : index
    %c0_53 = arith.constant 0 : index
    %c0_54 = arith.constant 0 : index
    %73 = vector.load %arg3[%c5_52, %c0_53, %c0_54] : memref<9x128x128xbf16, #tpu.memory_space<vmem>>, vector<1x128x128xbf16>
    %74 = vector.shape_cast %73 : vector<1x128x128xbf16> to vector<128x128xbf16>
    %cst_55 = arith.constant dense<0.000000e+00> : vector<16x128xf32>
    %75 = tpu.matmul %72, %74, %cst_55 {dimension_numbers = #tpu.dot_dimension_numbers<[1], [0], [0], [1], [0, 0, 1, 1], [], []>} : vector<16x128xbf16>, vector<128x128xbf16>, vector<16x128xf32> -> vector<16x128xf32>
    %76 = arith.addf %64, %75 : vector<16x128xf32>
    %c6 = arith.constant 6 : index
    %c0_56 = arith.constant 0 : index
    %c0_57 = arith.constant 0 : index
    %77 = vector.load %arg1[%c6, %c0_56, %c0_57] : memref<9x16x128xbf16, #tpu.memory_space<vmem>>, vector<1x16x128xbf16>
    %78 = vector.shape_cast %77 : vector<1x16x128xbf16> to vector<16x128xbf16>
    %cst_58 = arith.constant dense<0.000000e+00> : vector<16x128xf32>
    %79 = tpu.matmul %78, %3, %cst_58 {dimension_numbers = #tpu.dot_dimension_numbers<[1], [0], [0], [1], [0, 0, 1, 1], [], []>} : vector<16x128xbf16>, vector<128x128xbf16>, vector<16x128xf32> -> vector<16x128xf32>
    %cst_59 = arith.constant 0.000000e+00 : f32
    %80 = vector.broadcast %cst_59 : f32 to vector<16x128xf32>
    %81 = arith.maximumf %79, %80 : vector<16x128xf32>
    %cst_60 = arith.constant 1.000000e+00 : f32
    %82 = vector.broadcast %cst_60 : f32 to vector<16x128xf32>
    %83 = arith.select %2, %82, %81 : vector<16x128xi1>, vector<16x128xf32>
    %84 = arith.truncf %83 : vector<16x128xf32> to vector<16x128xbf16>
    %c6_61 = arith.constant 6 : index
    %c0_62 = arith.constant 0 : index
    %c0_63 = arith.constant 0 : index
    %85 = vector.load %arg3[%c6_61, %c0_62, %c0_63] : memref<9x128x128xbf16, #tpu.memory_space<vmem>>, vector<1x128x128xbf16>
    %86 = vector.shape_cast %85 : vector<1x128x128xbf16> to vector<128x128xbf16>
    %cst_64 = arith.constant dense<0.000000e+00> : vector<16x128xf32>
    %87 = tpu.matmul %84, %86, %cst_64 {dimension_numbers = #tpu.dot_dimension_numbers<[1], [0], [0], [1], [0, 0, 1, 1], [], []>} : vector<16x128xbf16>, vector<128x128xbf16>, vector<16x128xf32> -> vector<16x128xf32>
    %88 = arith.addf %76, %87 : vector<16x128xf32>
    %c7 = arith.constant 7 : index
    %c0_65 = arith.constant 0 : index
    %c0_66 = arith.constant 0 : index
    %89 = vector.load %arg1[%c7, %c0_65, %c0_66] : memref<9x16x128xbf16, #tpu.memory_space<vmem>>, vector<1x16x128xbf16>
    %90 = vector.shape_cast %89 : vector<1x16x128xbf16> to vector<16x128xbf16>
    %cst_67 = arith.constant dense<0.000000e+00> : vector<16x128xf32>
    %91 = tpu.matmul %90, %3, %cst_67 {dimension_numbers = #tpu.dot_dimension_numbers<[1], [0], [0], [1], [0, 0, 1, 1], [], []>} : vector<16x128xbf16>, vector<128x128xbf16>, vector<16x128xf32> -> vector<16x128xf32>
    %cst_68 = arith.constant 0.000000e+00 : f32
    %92 = vector.broadcast %cst_68 : f32 to vector<16x128xf32>
    %93 = arith.maximumf %91, %92 : vector<16x128xf32>
    %cst_69 = arith.constant 1.000000e+00 : f32
    %94 = vector.broadcast %cst_69 : f32 to vector<16x128xf32>
    %95 = arith.select %2, %94, %93 : vector<16x128xi1>, vector<16x128xf32>
    %96 = arith.truncf %95 : vector<16x128xf32> to vector<16x128xbf16>
    %c7_70 = arith.constant 7 : index
    %c0_71 = arith.constant 0 : index
    %c0_72 = arith.constant 0 : index
    %97 = vector.load %arg3[%c7_70, %c0_71, %c0_72] : memref<9x128x128xbf16, #tpu.memory_space<vmem>>, vector<1x128x128xbf16>
    %98 = vector.shape_cast %97 : vector<1x128x128xbf16> to vector<128x128xbf16>
    %cst_73 = arith.constant dense<0.000000e+00> : vector<16x128xf32>
    %99 = tpu.matmul %96, %98, %cst_73 {dimension_numbers = #tpu.dot_dimension_numbers<[1], [0], [0], [1], [0, 0, 1, 1], [], []>} : vector<16x128xbf16>, vector<128x128xbf16>, vector<16x128xf32> -> vector<16x128xf32>
    %100 = arith.addf %88, %99 : vector<16x128xf32>
    %c8 = arith.constant 8 : index
    %c0_74 = arith.constant 0 : index
    %c0_75 = arith.constant 0 : index
    %101 = vector.load %arg1[%c8, %c0_74, %c0_75] : memref<9x16x128xbf16, #tpu.memory_space<vmem>>, vector<1x16x128xbf16>
    %102 = vector.shape_cast %101 : vector<1x16x128xbf16> to vector<16x128xbf16>
    %cst_76 = arith.constant dense<0.000000e+00> : vector<16x128xf32>
    %103 = tpu.matmul %102, %3, %cst_76 {dimension_numbers = #tpu.dot_dimension_numbers<[1], [0], [0], [1], [0, 0, 1, 1], [], []>} : vector<16x128xbf16>, vector<128x128xbf16>, vector<16x128xf32> -> vector<16x128xf32>
    %cst_77 = arith.constant 0.000000e+00 : f32
    %104 = vector.broadcast %cst_77 : f32 to vector<16x128xf32>
    %105 = arith.maximumf %103, %104 : vector<16x128xf32>
    %cst_78 = arith.constant 1.000000e+00 : f32
    %106 = vector.broadcast %cst_78 : f32 to vector<16x128xf32>
    %107 = arith.select %2, %106, %105 : vector<16x128xi1>, vector<16x128xf32>
    %108 = arith.truncf %107 : vector<16x128xf32> to vector<16x128xbf16>
    %c8_79 = arith.constant 8 : index
    %c0_80 = arith.constant 0 : index
    %c0_81 = arith.constant 0 : index
    %109 = vector.load %arg3[%c8_79, %c0_80, %c0_81] : memref<9x128x128xbf16, #tpu.memory_space<vmem>>, vector<1x128x128xbf16>
    %110 = vector.shape_cast %109 : vector<1x128x128xbf16> to vector<128x128xbf16>
    %cst_82 = arith.constant dense<0.000000e+00> : vector<16x128xf32>
    %111 = tpu.matmul %108, %110, %cst_82 {dimension_numbers = #tpu.dot_dimension_numbers<[1], [0], [0], [1], [0, 0, 1, 1], [], []>} : vector<16x128xbf16>, vector<128x128xbf16>, vector<16x128xf32> -> vector<16x128xf32>
    %112 = arith.addf %100, %111 : vector<16x128xf32>
    %cst_83 = arith.constant 0.000000e+00 : f32
    %113 = vector.broadcast %cst_83 : f32 to vector<16x128xf32>
    %114 = arith.maximumf %112, %113 : vector<16x128xf32>
    %cst_84 = arith.constant 1.000000e+00 : f32
    %115 = vector.broadcast %cst_84 : f32 to vector<16x128xf32>
    %116 = arith.select %2, %115, %114 : vector<16x128xi1>, vector<16x128xf32>
    %117 = arith.truncf %116 : vector<16x128xf32> to vector<16x128xbf16>
    %c0_85 = arith.constant 0 : index
    %c0_86 = arith.constant 0 : index
    %118 = vector.load %arg4[%c0_85, %c0_86] : memref<128x384xbf16, #tpu.memory_space<vmem>>, vector<128x384xbf16>
    %cst_87 = arith.constant dense<0.000000e+00> : vector<16x384xf32>
    %119 = tpu.matmul %117, %118, %cst_87 {dimension_numbers = #tpu.dot_dimension_numbers<[1], [0], [0], [1], [0, 0, 1, 1], [], []>} : vector<16x128xbf16>, vector<128x384xbf16>, vector<16x384xf32> -> vector<16x384xf32>
    %120 = math.absf %119 : vector<16x384xf32>
    %cst_88 = arith.constant 0.000000e+00 : f32
    %121 = vector.broadcast %cst_88 : f32 to vector<16x384xf32>
    %122 = arith.subf %121, %120 : vector<16x384xf32>
    %123 = math.exp %122 : vector<16x384xf32>
    %cst_89 = arith.constant 1.000000e+00 : f32
    %124 = vector.broadcast %cst_89 : f32 to vector<16x384xf32>
    %125 = arith.addf %124, %123 : vector<16x384xf32>
    %cst_90 = arith.constant 1.000000e+00 : f32
    %126 = vector.broadcast %cst_90 : f32 to vector<16x384xf32>
    %127 = arith.divf %126, %125 : vector<16x384xf32>
    %cst_91 = arith.constant 0.000000e+00 : f32
    %128 = vector.broadcast %cst_91 : f32 to vector<16x384xf32>
    %129 = arith.cmpf oge, %119, %128 : vector<16x384xf32>
    %130 = arith.mulf %123, %127 : vector<16x384xf32>
    %131 = arith.select %129, %127, %130 : vector<16x384xi1>, vector<16x384xf32>
    %c0_92 = arith.constant 0 : index
    %c0_93 = arith.constant 0 : index
    %132 = vector.load %arg5[%c0_92, %c0_93] : memref<16x384xf32, #tpu.memory_space<vmem>>, vector<16x384xf32>
    tpu.vector_store %arg5[%c0_92, %c0_93], %131 {strides = array<i32>} : memref<16x384xf32, #tpu.memory_space<vmem>>, vector<16x384xf32>,
    return
  }
  func.func @transform_0(%arg0: i32) -> (i32, i32, i32) {
    %c0_i32 = arith.constant 0 : i32
    %c0_i32_0 = arith.constant 0 : i32
    %c0_i32_1 = arith.constant 0 : i32
    return %c0_i32, %arg0, %c0_i32_0 : i32, i32, i32
  }
  func.func @transform_1(%arg0: i32) -> (i32, i32) {
    %c0_i32 = arith.constant 0 : i32
    %c0_i32_0 = arith.constant 0 : i32
    %c0_i32_1 = arith.constant 0 : i32
    return %c0_i32, %c0_i32_0 : i32, i32
  }
  func.func @transform_2(%arg0: i32) -> (i32, i32, i32) {
    %c0_i32 = arith.constant 0 : i32
    %c0_i32_0 = arith.constant 0 : i32
    %c0_i32_1 = arith.constant 0 : i32
    %c0_i32_2 = arith.constant 0 : i32
    return %c0_i32, %c0_i32_0, %c0_i32_1 : i32, i32, i32
  }
  func.func @transform_3(%arg0: i32) -> (i32, i32) {
    %c0_i32 = arith.constant 0 : i32
    %c0_i32_0 = arith.constant 0 : i32
    %c0_i32_1 = arith.constant 0 : i32
    return %c0_i32, %c0_i32_0 : i32, i32
  }
  func.func @transform_4(%arg0: i32) -> (i32, i32) {
    %c0_i32 = arith.constant 0 : i32
    %c0_i32_0 = arith.constant 0 : i32
    return %arg0, %c0_i32 : i32, i32
  }
}

</mosaic_0001>

<llo_original>
// kernel: attention_module_w.1
$region0: #{attention_module_w.1}
  #allocation0 [shape = 'u32[]', space=smem, size = 0x4, offset = 0x4, fixed_abs, tag = 'smem constant byte address 0x4 - core index']
  #allocation1 [shape = 'u32[144,128]{1,0:T(1,128)}', space=vmem, size = 0x12000, scoped, tag = 'internal scratch']
  %s0 = inlined_call_operand.vmem [shape: bf16[9,16,128], index: 0, kind: input, shape index: {}]
  %s1 = inlined_call_operand.vmem [shape: bf16[128,128], index: 1, kind: input, shape index: {}]
  %s2 = inlined_call_operand.vmem [shape: bf16[9,128,128], index: 2, kind: input, shape index: {}]
  %s3 = inlined_call_operand.vmem [shape: bf16[128,384], index: 3, kind: input, shape index: {}]
  %s4 = inlined_call_operand.vmem [shape: f32[16,384], index: 4, kind: output, shape index: {}]
  %s5 = sld [smem:[#allocation0]]
  $region26: #{attention_module_w.1} parent=0
    _
  %s7 = ssub.s32 1, %s5
  %s8 = scalar_select 0, %s7, %s5
  // Predicated region
  $region2: #{attention_module_w.1} parent=0 // pred_check
    _
  $region3: #{attention_module_w.1} parent=0 // pred_check_branch
    %10 = sbr.rel (0) target = $region5
  $region4: #{attention_module_w.1} parent=0 // pred_region
    _
  $region5: #{attention_module_w.1} parent=0 // pred_fallthru
    _
  // Predicated region
  $region6: #{attention_module_w.1} parent=0 // pred_check
    _
  $region7: #{attention_module_w.1} parent=0 // pred_check_branch
    %12 = sbr.rel (0) target = $region9
  $region8: #{attention_module_w.1} parent=0 // pred_region
    _
  $region9: #{attention_module_w.1} parent=0 // pred_fallthru
    _
  // Predicated region
  $region10: #{attention_module_w.1} parent=0 // pred_check
    _
  $region11: #{attention_module_w.1} parent=0 // pred_check_branch
    %14 = sbr.rel (0) target = $region13
  $region12: #{attention_module_w.1} parent=0 // pred_region
    _
  $region13: #{attention_module_w.1} parent=0 // pred_fallthru
    _
  // Predicated region
  $region14: #{attention_module_w.1} parent=0 // pred_check
    _
  $region15: #{attention_module_w.1} parent=0 // pred_check_branch
    %16 = sbr.rel (0) target = $region17
  $region16: #{attention_module_w.1} parent=0 // pred_region
    _
  $region17: #{attention_module_w.1} parent=0 // pred_fallthru
    _
  %v18 = vlaneseq
  %v19 = vand.u32 %v18, 127
  %vm20 = vcmp.eq.s32.totalorder %v19, 4
  %v21 = vld [vmem:[%s1] sm:$0xf]
  %v22 = vld [vmem:[%s1 + $0x4] sm:$0xf]
  %v23 = vld [vmem:[%s1 + $0x8] sm:$0xf]
  %v24 = vld [vmem:[%s1 + $0xc] sm:$0xf]
  %v25 = vld [vmem:[%s1 + $0x10] sm:$0xf]
  %v26 = vld [vmem:[%s1 + $0x14] sm:$0xf]
  %v27 = vld [vmem:[%s1 + $0x18] sm:$0xf]
  %v28 = vld [vmem:[%s1 + $0x1c] sm:$0xf]
  %v29 = vld [vmem:[%s1 + $0x20] sm:$0xf]
  %v30 = vld [vmem:[%s1 + $0x24] sm:$0xf]
  %v31 = vld [vmem:[%s1 + $0x28] sm:$0xf]
  %v32 = vld [vmem:[%s1 + $0x2c] sm:$0xf]
  %v33 = vld [vmem:[%s1 + $0x30] sm:$0xf]
  %v34 = vld [vmem:[%s1 + $0x34] sm:$0xf]
  %v35 = vld [vmem:[%s1 + $0x38] sm:$0xf]
  %v36 = vld [vmem:[%s1 + $0x3c] sm:$0xf]
  %v37 = vld [vmem:[%s0] sm:$0xf]
  %v38 = vld [vmem:[%s0 + $0x4] sm:$0xf]
  %v41 = vunpack.c.l.b16 %v37
  %v42 = vunpack.c.l.b16 %v38
  %v43 = vpack.c.b16 %v42, %v41
  %v61 = vunpack.c.l.b16 %v21
  %v62 = vunpack.c.l.b16 %v22
  %v63 = vunpack.c.l.b16 %v23
  %v64 = vunpack.c.l.b16 %v24
  %v65 = vunpack.c.l.b16 %v25
  %v66 = vunpack.c.l.b16 %v26
  %v67 = vunpack.c.l.b16 %v27
  %v68 = vunpack.c.l.b16 %v28
  %v69 = vunpack.c.l.b16 %v29
  %v70 = vunpack.c.l.b16 %v30
  %v71 = vunpack.c.l.b16 %v31
  %v72 = vunpack.c.l.b16 %v32
  %v73 = vunpack.c.l.b16 %v33
  %v74 = vunpack.c.l.b16 %v34
  %v75 = vunpack.c.l.b16 %v35
  %v76 = vunpack.c.l.b16 %v36
  %v77 = vpack.c.b16 %v62, %v61
  %v78 = vpack.c.b16 %v64, %v63
  %v79 = vpack.c.b16 %v66, %v65
  %v80 = vpack.c.b16 %v68, %v67
  %v81 = vpack.c.b16 %v70, %v69
  %v82 = vpack.c.b16 %v72, %v71
  %v83 = vpack.c.b16 %v74, %v73
  %v84 = vpack.c.b16 %v76, %v75
  %93 = vmatprep.subr.bf16.mxu0 0
  %94 = vmatpush1.bf16.msra.mxu0 %v77
  %95 = vmatprep.subr.bf16.mxu0 0
  %96 = vmatpush1.bf16.msra.mxu0 %v78
  %97 = vmatprep.subr.bf16.mxu0 0
  %98 = vmatpush1.bf16.msra.mxu0 %v79
  %99 = vmatprep.subr.bf16.mxu0 0
  %100 = vmatpush1.bf16.msra.mxu0 %v80
  %101 = vmatprep.subr.bf16.mxu0 0
  %102 = vmatpush1.bf16.msra.mxu0 %v81
  %103 = vmatprep.subr.bf16.mxu0 0
  %104 = vmatpush1.bf16.msra.mxu0 %v82
  %105 = vmatprep.subr.bf16.mxu0 0
  %106 = vmatpush1.bf16.msra.mxu0 %v83
  %107 = vmatprep.subr.bf16.mxu0 0
  %108 = vmatpush1.bf16.msra.mxu0 %v84
  %109 = vmatprep.subr.bf16.mxu0 0
  %110 = vmatpush1.bf16.msra.mxu0 0
  %111 = vmatprep.subr.bf16.mxu0 0
  %112 = vmatpush1.bf16.msra.mxu0 0
  %113 = vmatprep.subr.bf16.mxu0 0
  %114 = vmatpush1.bf16.msra.mxu0 0
  %115 = vmatprep.subr.bf16.mxu0 0
  %116 = vmatpush1.bf16.msra.mxu0 0
  %117 = vmatprep.subr.bf16.mxu0 0
  %118 = vmatpush1.bf16.msra.mxu0 0
  %119 = vmatprep.subr.bf16.mxu0 0
  %120 = vmatpush1.bf16.msra.mxu0 0
  %121 = vmatprep.subr.bf16.mxu0 0
  %122 = vmatpush1.bf16.msra.mxu0 0
  %123 = vmatprep.subr.bf16.mxu0 0
  %124 = vmatpush1.bf16.msra.mxu0 0
  %125 = vmatprep.mubr.bf16.mxu0 0
  %126 = vmatmul.mubr.bf16.gmra.mrb[0].mxu0 %v43
  %v127 = vpop.f32.mrb[0].mxu0
  %v128 = vadd.f32 0.0, %v127
  %v129 = vpop.f32.mrb[0].mxu0
  %v130 = vpop.f32.mrb[0].mxu0
  %v131 = vadd.f32 0.0, %v130
  %v132 = vpop.f32.mrb[0].mxu0
  %133 = vdwg.mxu0
  %v134 = vmax.f32 %v128, 0.0
  %v135 = vmax.f32 %v131, 0.0
  %v136 = vsel %vm20, 1.0, %v134
  %v137 = vsel %vm20, 1.0, %v135
  %v138 = vpack.c.bf16 %v137, %v136
  %v139 = vld [vmem:[%s2] sm:$0xf]
  %v140 = vld [vmem:[%s2 + $0x4] sm:$0xf]
  %v141 = vld [vmem:[%s2 + $0x8] sm:$0xf]
  %v142 = vld [vmem:[%s2 + $0xc] sm:$0xf]
  %v143 = vld [vmem:[%s2 + $0x10] sm:$0xf]
  %v144 = vld [vmem:[%s2 + $0x14] sm:$0xf]
  %v145 = vld [vmem:[%s2 + $0x18] sm:$0xf]
  %v146 = vld [vmem:[%s2 + $0x1c] sm:$0xf]
  %v147 = vld [vmem:[%s2 + $0x20] sm:$0xf]
  %v148 = vld [vmem:[%s2 + $0x24] sm:$0xf]
  %v149 = vld [vmem:[%s2 + $0x28] sm:$0xf]
  %v150 = vld [vmem:[%s2 + $0x2c] sm:$0xf]
  %v151 = vld [vmem:[%s2 + $0x30] sm:$0xf]
  %v152 = vld [vmem:[%s2 + $0x34] sm:$0xf]
  %v153 = vld [vmem:[%s2 + $0x38] sm:$0xf]
  %v154 = vld [vmem:[%s2 + $0x3c] sm:$0xf]
  %s155 = scalar_lea.vmem %s0, 8
  %v156 = vld [vmem:[%s155] sm:$0xf]
  %v157 = vld [vmem:[%s155 + $0x4] sm:$0xf]
  %v160 = vunpack.c.l.b16 %v156
  %v161 = vunpack.c.l.b16 %v157
  %v162 = vpack.c.b16 %v161, %v160
  %164 = vmatprep.subr.bf16.mxu0 0
  %165 = vmatpush1.bf16.msra.mxu0 %v77
  %166 = vmatprep.subr.bf16.mxu0 0
  %167 = vmatpush1.bf16.msra.mxu0 %v78
  %168 = vmatprep.subr.bf16.mxu0 0
  %169 = vmatpush1.bf16.msra.mxu0 %v79
  %170 = vmatprep.subr.bf16.mxu0 0
  %171 = vmatpush1.bf16.msra.mxu0 %v80
  %172 = vmatprep.subr.bf16.mxu0 0
  %173 = vmatpush1.bf16.msra.mxu0 %v81
  %174 = vmatprep.subr.bf16.mxu0 0
  %175 = vmatpush1.bf16.msra.mxu0 %v82
  %176 = vmatprep.subr.bf16.mxu0 0
  %177 = vmatpush1.bf16.msra.mxu0 %v83
  %178 = vmatprep.subr.bf16.mxu0 0
  %179 = vmatpush1.bf16.msra.mxu0 %v84
  %180 = vmatprep.subr.bf16.mxu0 0
  %181 = vmatpush1.bf16.msra.mxu0 0
  %182 = vmatprep.subr.bf16.mxu0 0
  %183 = vmatpush1.bf16.msra.mxu0 0
  %184 = vmatprep.subr.bf16.mxu0 0
  %185 = vmatpush1.bf16.msra.mxu0 0
  %186 = vmatprep.subr.bf16.mxu0 0
  %187 = vmatpush1.bf16.msra.mxu0 0
  %188 = vmatprep.subr.bf16.mxu0 0
  %189 = vmatpush1.bf16.msra.mxu0 0
  %190 = vmatprep.subr.bf16.mxu0 0
  %191 = vmatpush1.bf16.msra.mxu0 0
  %192 = vmatprep.subr.bf16.mxu0 0
  %193 = vmatpush1.bf16.msra.mxu0 0
  %194 = vmatprep.subr.bf16.mxu0 0
  %195 = vmatpush1.bf16.msra.mxu0 0
  %196 = vmatprep.mubr.bf16.mxu0 0
  %197 = vmatmul.mubr.bf16.gmra.mrb[0].mxu0 %v162
  %v198 = vpop.f32.mrb[0].mxu0
  %v199 = vadd.f32 0.0, %v198
  %v200 = vpop.f32.mrb[0].mxu0
  %v201 = vpop.f32.mrb[0].mxu0
  %v202 = vadd.f32 0.0, %v201
  %v203 = vpop.f32.mrb[0].mxu0
  %204 = vdwg.mxu0
  %v205 = vmax.f32 %v199, 0.0
  %v206 = vmax.f32 %v202, 0.0
  %v207 = vsel %vm20, 1.0, %v205
  %v208 = vsel %vm20, 1.0, %v206
  %v209 = vpack.c.bf16 %v208, %v207
  %s210 = scalar_lea.vmem %s2, 64
  %v211 = vld [vmem:[%s210] sm:$0xf]
  %v212 = vld [vmem:[%s210 + $0x4] sm:$0xf]
  %v213 = vld [vmem:[%s210 + $0x8] sm:$0xf]
  %v214 = vld [vmem:[%s210 + $0xc] sm:$0xf]
  %v215 = vld [vmem:[%s210 + $0x10] sm:$0xf]
  %v216 = vld [vmem:[%s210 + $0x14] sm:$0xf]
  %v217 = vld [vmem:[%s210 + $0x18] sm:$0xf]
  %v218 = vld [vmem:[%s210 + $0x1c] sm:$0xf]
  %v219 = vld [vmem:[%s210 + $0x20] sm:$0xf]
  %v220 = vld [vmem:[%s210 + $0x24] sm:$0xf]
  %v221 = vld [vmem:[%s210 + $0x28] sm:$0xf]
  %v222 = vld [vmem:[%s210 + $0x2c] sm:$0xf]
  %v223 = vld [vmem:[%s210 + $0x30] sm:$0xf]
  %v224 = vld [vmem:[%s210 + $0x34] sm:$0xf]
  %v225 = vld [vmem:[%s210 + $0x38] sm:$0xf]
  %v226 = vld [vmem:[%s210 + $0x3c] sm:$0xf]
  %v243 = vunpack.c.l.b16 %v211
  %v244 = vunpack.c.l.b16 %v212
  %v245 = vunpack.c.l.b16 %v213
  %v246 = vunpack.c.l.b16 %v214
  %v247 = vunpack.c.l.b16 %v215
  %v248 = vunpack.c.l.b16 %v216
  %v249 = vunpack.c.l.b16 %v217
  %v250 = vunpack.c.l.b16 %v218
  %v251 = vunpack.c.l.b16 %v219
  %v252 = vunpack.c.l.b16 %v220
  %v253 = vunpack.c.l.b16 %v221
  %v254 = vunpack.c.l.b16 %v222
  %v255 = vunpack.c.l.b16 %v223
  %v256 = vunpack.c.l.b16 %v224
  %v257 = vunpack.c.l.b16 %v225
  %v258 = vunpack.c.l.b16 %v226
  %v259 = vpack.c.b16 %v244, %v243
  %v260 = vpack.c.b16 %v246, %v245
  %v261 = vpack.c.b16 %v248, %v247
  %v262 = vpack.c.b16 %v250, %v249
  %v263 = vpack.c.b16 %v252, %v251
  %v264 = vpack.c.b16 %v254, %v253
  %v265 = vpack.c.b16 %v256, %v255
  %v266 = vpack.c.b16 %v258, %v257
  %275 = vmatprep.subr.bf16.mxu0 0
  %276 = vmatpush1.bf16.msra.mxu0 %v259
  %277 = vmatprep.subr.bf16.mxu0 0
  %278 = vmatpush1.bf16.msra.mxu0 %v260
  %279 = vmatprep.subr.bf16.mxu0 0
  %280 = vmatpush1.bf16.msra.mxu0 %v261
  %281 = vmatprep.subr.bf16.mxu0 0
  %282 = vmatpush1.bf16.msra.mxu0 %v262
  %283 = vmatprep.subr.bf16.mxu0 0
  %284 = vmatpush1.bf16.msra.mxu0 %v263
  %285 = vmatprep.subr.bf16.mxu0 0
  %286 = vmatpush1.bf16.msra.mxu0 %v264
  %287 = vmatprep.subr.bf16.mxu0 0
  %288 = vmatpush1.bf16.msra.mxu0 %v265
  %289 = vmatprep.subr.bf16.mxu0 0
  %290 = vmatpush1.bf16.msra.mxu0 %v266
  %291 = vmatprep.subr.bf16.mxu0 0
  %292 = vmatpush1.bf16.msra.mxu0 0
  %293 = vmatprep.subr.bf16.mxu0 0
  %294 = vmatpush1.bf16.msra.mxu0 0
  %295 = vmatprep.subr.bf16.mxu0 0
  %296 = vmatpush1.bf16.msra.mxu0 0
  %297 = vmatprep.subr.bf16.mxu0 0
  %298 = vmatpush1.bf16.msra.mxu0 0
  %299 = vmatprep.subr.bf16.mxu0 0
  %300 = vmatpush1.bf16.msra.mxu0 0
  %301 = vmatprep.subr.bf16.mxu0 0
  %302 = vmatpush1.bf16.msra.mxu0 0
  %303 = vmatprep.subr.bf16.mxu0 0
  %304 = vmatpush1.bf16.msra.mxu0 0
  %305 = vmatprep.subr.bf16.mxu0 0
  %306 = vmatpush1.bf16.msra.mxu0 0
  %307 = vmatprep.mubr.bf16.mxu0 0
  %308 = vmatmul.mubr.bf16.gmra.mrb[0].mxu0 %v209
  %v309 = vpop.f32.mrb[0].mxu0
  %v310 = vadd.f32 0.0, %v309
  %v311 = vpop.f32.mrb[0].mxu0
  %v312 = vpop.f32.mrb[0].mxu0
  %v313 = vadd.f32 0.0, %v312
  %v314 = vpop.f32.mrb[0].mxu0
  %315 = vdwg.mxu0
  %v332 = vunpack.c.l.b16 %v139
  %v333 = vunpack.c.l.b16 %v140
  %v334 = vunpack.c.l.b16 %v141
  %v335 = vunpack.c.l.b16 %v142
  %v336 = vunpack.c.l.b16 %v143
  %v337 = vunpack.c.l.b16 %v144
  %v338 = vunpack.c.l.b16 %v145
  %v339 = vunpack.c.l.b16 %v146
  %v340 = vunpack.c.l.b16 %v147
  %v341 = vunpack.c.l.b16 %v148
  %v342 = vunpack.c.l.b16 %v149
  %v343 = vunpack.c.l.b16 %v150
  %v344 = vunpack.c.l.b16 %v151
  %v345 = vunpack.c.l.b16 %v152
  %v346 = vunpack.c.l.b16 %v153
  %v347 = vunpack.c.l.b16 %v154
  %v348 = vpack.c.b16 %v333, %v332
  %v349 = vpack.c.b16 %v335, %v334
  %v350 = vpack.c.b16 %v337, %v336
  %v351 = vpack.c.b16 %v339, %v338
  %v352 = vpack.c.b16 %v341, %v340
  %v353 = vpack.c.b16 %v343, %v342
  %v354 = vpack.c.b16 %v345, %v344
  %v355 = vpack.c.b16 %v347, %v346
  %364 = vmatprep.subr.bf16.mxu0 0
  %365 = vmatpush1.bf16.msra.mxu0 %v348
  %366 = vmatprep.subr.bf16.mxu0 0
  %367 = vmatpush1.bf16.msra.mxu0 %v349
  %368 = vmatprep.subr.bf16.mxu0 0
  %369 = vmatpush1.bf16.msra.mxu0 %v350
  %370 = vmatprep.subr.bf16.mxu0 0
  %371 = vmatpush1.bf16.msra.mxu0 %v351
  %372 = vmatprep.subr.bf16.mxu0 0
  %373 = vmatpush1.bf16.msra.mxu0 %v352
  %374 = vmatprep.subr.bf16.mxu0 0
  %375 = vmatpush1.bf16.msra.mxu0 %v353
  %376 = vmatprep.subr.bf16.mxu0 0
  %377 = vmatpush1.bf16.msra.mxu0 %v354
  %378 = vmatprep.subr.bf16.mxu0 0
  %379 = vmatpush1.bf16.msra.mxu0 %v355
  %380 = vmatprep.subr.bf16.mxu0 0
  %381 = vmatpush1.bf16.msra.mxu0 0
  %382 = vmatprep.subr.bf16.mxu0 0
  %383 = vmatpush1.bf16.msra.mxu0 0
  %384 = vmatprep.subr.bf16.mxu0 0
  %385 = vmatpush1.bf16.msra.mxu0 0
  %386 = vmatprep.subr.bf16.mxu0 0
  %387 = vmatpush1.bf16.msra.mxu0 0
  %388 = vmatprep.subr.bf16.mxu0 0
  %389 = vmatpush1.bf16.msra.mxu0 0
  %390 = vmatprep.subr.bf16.mxu0 0
  %391 = vmatpush1.bf16.msra.mxu0 0
  %392 = vmatprep.subr.bf16.mxu0 0
  %393 = vmatpush1.bf16.msra.mxu0 0
  %394 = vmatprep.subr.bf16.mxu0 0
  %395 = vmatpush1.bf16.msra.mxu0 0
  %396 = vmatprep.mubr.bf16.mxu0 0
  %397 = vmatmul.mubr.bf16.gmra.mrb[0].mxu0 %v138
  %v398 = vpop.f32.mrb[0].mxu0
  %v399 = vadd.f32 %v310, %v398
  %v400 = vpop.f32.mrb[0].mxu0
  %v401 = vpop.f32.mrb[0].mxu0
  %v402 = vadd.f32 %v313, %v401
  %v403 = vpop.f32.mrb[0].mxu0
  %404 = vdwg.mxu0
  %s405 = scalar_lea.vmem %s0, 16
  %v406 = vld [vmem:[%s405] sm:$0xf]
  %v407 = vld [vmem:[%s405 + $0x4] sm:$0xf]
  %v410 = vunpack.c.l.b16 %v406
  %v411 = vunpack.c.l.b16 %v407
  %v412 = vpack.c.b16 %v411, %v410
  %414 = vmatprep.subr.bf16.mxu0 0
  %415 = vmatpush1.bf16.msra.mxu0 %v77
  %416 = vmatprep.subr.bf16.mxu0 0
  %417 = vmatpush1.bf16.msra.mxu0 %v78
  %418 = vmatprep.subr.bf16.mxu0 0
  %419 = vmatpush1.bf16.msra.mxu0 %v79
  %420 = vmatprep.subr.bf16.mxu0 0
  %421 = vmatpush1.bf16.msra.mxu0 %v80
  %422 = vmatprep.subr.bf16.mxu0 0
  %423 = vmatpush1.bf16.msra.mxu0 %v81
  %424 = vmatprep.subr.bf16.mxu0 0
  %425 = vmatpush1.bf16.msra.mxu0 %v82
  %426 = vmatprep.subr.bf16.mxu0 0
  %427 = vmatpush1.bf16.msra.mxu0 %v83
  %428 = vmatprep.subr.bf16.mxu0 0
  %429 = vmatpush1.bf16.msra.mxu0 %v84
  %430 = vmatprep.subr.bf16.mxu0 0
  %431 = vmatpush1.bf16.msra.mxu0 0
  %432 = vmatprep.subr.bf16.mxu0 0
  %433 = vmatpush1.bf16.msra.mxu0 0
  %434 = vmatprep.subr.bf16.mxu0 0
  %435 = vmatpush1.bf16.msra.mxu0 0
  %436 = vmatprep.subr.bf16.mxu0 0
  %437 = vmatpush1.bf16.msra.mxu0 0
  %438 = vmatprep.subr.bf16.mxu0 0
  %439 = vmatpush1.bf16.msra.mxu0 0
  %440 = vmatprep.subr.bf16.mxu0 0
  %441 = vmatpush1.bf16.msra.mxu0 0
  %442 = vmatprep.subr.bf16.mxu0 0
  %443 = vmatpush1.bf16.msra.mxu0 0
  %444 = vmatprep.subr.bf16.mxu0 0
  %445 = vmatpush1.bf16.msra.mxu0 0
  %446 = vmatprep.mubr.bf16.mxu0 0
  %447 = vmatmul.mubr.bf16.gmra.mrb[0].mxu0 %v412
  %v448 = vpop.f32.mrb[0].mxu0
  %v449 = vadd.f32 0.0, %v448
  %v450 = vpop.f32.mrb[0].mxu0
  %v451 = vpop.f32.mrb[0].mxu0
  %v452 = vadd.f32 0.0, %v451
  %v453 = vpop.f32.mrb[0].mxu0
  %454 = vdwg.mxu0
  %v455 = vmax.f32 %v449, 0.0
  %v456 = vmax.f32 %v452, 0.0
  %v457 = vsel %vm20, 1.0, %v455
  %v458 = vsel %vm20, 1.0, %v456
  %v459 = vpack.c.bf16 %v458, %v457
  %s460 = scalar_lea.vmem %s2, 128
  %v461 = vld [vmem:[%s460] sm:$0xf]
  %v462 = vld [vmem:[%s460 + $0x4] sm:$0xf]
  %v463 = vld [vmem:[%s460 + $0x8] sm:$0xf]
  %v464 = vld [vmem:[%s460 + $0xc] sm:$0xf]
  %v465 = vld [vmem:[%s460 + $0x10] sm:$0xf]
  %v466 = vld [vmem:[%s460 + $0x14] sm:$0xf]
  %v467 = vld [vmem:[%s460 + $0x18] sm:$0xf]
  %v468 = vld [vmem:[%s460 + $0x1c] sm:$0xf]
  %v469 = vld [vmem:[%s460 + $0x20] sm:$0xf]
  %v470 = vld [vmem:[%s460 + $0x24] sm:$0xf]
  %v471 = vld [vmem:[%s460 + $0x28] sm:$0xf]
  %v472 = vld [vmem:[%s460 + $0x2c] sm:$0xf]
  %v473 = vld [vmem:[%s460 + $0x30] sm:$0xf]
  %v474 = vld [vmem:[%s460 + $0x34] sm:$0xf]
  %v475 = vld [vmem:[%s460 + $0x38] sm:$0xf]
  %v476 = vld [vmem:[%s460 + $0x3c] sm:$0xf]
  %v493 = vunpack.c.l.b16 %v461
  %v494 = vunpack.c.l.b16 %v462
  %v495 = vunpack.c.l.b16 %v463
  %v496 = vunpack.c.l.b16 %v464
  %v497 = vunpack.c.l.b16 %v465
  %v498 = vunpack.c.l.b16 %v466
  %v499 = vunpack.c.l.b16 %v467
  %v500 = vunpack.c.l.b16 %v468
  %v501 = vunpack.c.l.b16 %v469
  %v502 = vunpack.c.l.b16 %v470
  %v503 = vunpack.c.l.b16 %v471
  %v504 = vunpack.c.l.b16 %v472
  %v505 = vunpack.c.l.b16 %v473
  %v506 = vunpack.c.l.b16 %v474
  %v507 = vunpack.c.l.b16 %v475
  %v508 = vunpack.c.l.b16 %v476
  %v509 = vpack.c.b16 %v494, %v493
  %v510 = vpack.c.b16 %v496, %v495
  %v511 = vpack.c.b16 %v498, %v497
  %v512 = vpack.c.b16 %v500, %v499
  %v513 = vpack.c.b16 %v502, %v501
  %v514 = vpack.c.b16 %v504, %v503
  %v515 = vpack.c.b16 %v506, %v505
  %v516 = vpack.c.b16 %v508, %v507
  %525 = vmatprep.subr.bf16.mxu0 0
  %526 = vmatpush1.bf16.msra.mxu0 %v509
  %527 = vmatprep.subr.bf16.mxu0 0
  %528 = vmatpush1.bf16.msra.mxu0 %v510
  %529 = vmatprep.subr.bf16.mxu0 0
  %530 = vmatpush1.bf16.msra.mxu0 %v511
  %531 = vmatprep.subr.bf16.mxu0 0
  %532 = vmatpush1.bf16.msra.mxu0 %v512
  %533 = vmatprep.subr.bf16.mxu0 0
  %534 = vmatpush1.bf16.msra.mxu0 %v513
  %535 = vmatprep.subr.bf16.mxu0 0
  %536 = vmatpush1.bf16.msra.mxu0 %v514
  %537 = vmatprep.subr.bf16.mxu0 0
  %538 = vmatpush1.bf16.msra.mxu0 %v515
  %539 = vmatprep.subr.bf16.mxu0 0
  %540 = vmatpush1.bf16.msra.mxu0 %v516
  %541 = vmatprep.subr.bf16.mxu0 0
  %542 = vmatpush1.bf16.msra.mxu0 0
  %543 = vmatprep.subr.bf16.mxu0 0
  %544 = vmatpush1.bf16.msra.mxu0 0
  %545 = vmatprep.subr.bf16.mxu0 0
  %546 = vmatpush1.bf16.msra.mxu0 0
  %547 = vmatprep.subr.bf16.mxu0 0
  %548 = vmatpush1.bf16.msra.mxu0 0
  %549 = vmatprep.subr.bf16.mxu0 0
  %550 = vmatpush1.bf16.msra.mxu0 0
  %551 = vmatprep.subr.bf16.mxu0 0
  %552 = vmatpush1.bf16.msra.mxu0 0
  %553 = vmatprep.subr.bf16.mxu0 0
  %554 = vmatpush1.bf16.msra.mxu0 0
  %555 = vmatprep.subr.bf16.mxu0 0
  %556 = vmatpush1.bf16.msra.mxu0 0
  %557 = vmatprep.mubr.bf16.mxu0 0
  %558 = vmatmul.mubr.bf16.gmra.mrb[0].mxu0 %v459
  %v559 = vpop.f32.mrb[0].mxu0
  %v560 = vadd.f32 0.0, %v559
  %v561 = vpop.f32.mrb[0].mxu0
  %v562 = vpop.f32.mrb[0].mxu0
  %v563 = vadd.f32 0.0, %v562
  %v564 = vpop.f32.mrb[0].mxu0
  %565 = vdwg.mxu0
  %v566 = vadd.f32 %v399, %v560
  %v567 = vadd.f32 %v402, %v563
  %s568 = scalar_lea.vmem %s0, 24
  %v569 = vld [vmem:[%s568] sm:$0xf]
  %v570 = vld [vmem:[%s568 + $0x4] sm:$0xf]
  %v573 = vunpack.c.l.b16 %v569
  %v574 = vunpack.c.l.b16 %v570
  %v575 = vpack.c.b16 %v574, %v573
  %577 = vmatprep.subr.bf16.mxu0 0
  %578 = vmatpush1.bf16.msra.mxu0 %v77
  %579 = vmatprep.subr.bf16.mxu0 0
  %580 = vmatpush1.bf16.msra.mxu0 %v78
  %581 = vmatprep.subr.bf16.mxu0 0
  %582 = vmatpush1.bf16.msra.mxu0 %v79
  %583 = vmatprep.subr.bf16.mxu0 0
  %584 = vmatpush1.bf16.msra.mxu0 %v80
  %585 = vmatprep.subr.bf16.mxu0 0
  %586 = vmatpush1.bf16.msra.mxu0 %v81
  %587 = vmatprep.subr.bf16.mxu0 0
  %588 = vmatpush1.bf16.msra.mxu0 %v82
  %589 = vmatprep.subr.bf16.mxu0 0
  %590 = vmatpush1.bf16.msra.mxu0 %v83
  %591 = vmatprep.subr.bf16.mxu0 0
  %592 = vmatpush1.bf16.msra.mxu0 %v84
  %593 = vmatprep.subr.bf16.mxu0 0
  %594 = vmatpush1.bf16.msra.mxu0 0
  %595 = vmatprep.subr.bf16.mxu0 0
  %596 = vmatpush1.bf16.msra.mxu0 0
  %597 = vmatprep.subr.bf16.mxu0 0
  %598 = vmatpush1.bf16.msra.mxu0 0
  %599 = vmatprep.subr.bf16.mxu0 0
  %600 = vmatpush1.bf16.msra.mxu0 0
  %601 = vmatprep.subr.bf16.mxu0 0
  %602 = vmatpush1.bf16.msra.mxu0 0
  %603 = vmatprep.subr.bf16.mxu0 0
  %604 = vmatpush1.bf16.msra.mxu0 0
  %605 = vmatprep.subr.bf16.mxu0 0
  %606 = vmatpush1.bf16.msra.mxu0 0
  %607 = vmatprep.subr.bf16.mxu0 0
  %608 = vmatpush1.bf16.msra.mxu0 0
  %609 = vmatprep.mubr.bf16.mxu0 0
  %610 = vmatmul.mubr.bf16.gmra.mrb[0].mxu0 %v575
  %v611 = vpop.f32.mrb[0].mxu0
  %v612 = vadd.f32 0.0, %v611
  %v613 = vpop.f32.mrb[0].mxu0
  %v614 = vpop.f32.mrb[0].mxu0
  %v615 = vadd.f32 0.0, %v614
  %v616 = vpop.f32.mrb[0].mxu0
  %617 = vdwg.mxu0
  %v618 = vmax.f32 %v612, 0.0
  %v619 = vmax.f32 %v615, 0.0
  %v620 = vsel %vm20, 1.0, %v618
  %v621 = vsel %vm20, 1.0, %v619
  %v622 = vpack.c.bf16 %v621, %v620
  %s623 = scalar_lea.vmem %s2, 192
  %v624 = vld [vmem:[%s623] sm:$0xf]
  %v625 = vld [vmem:[%s623 + $0x4] sm:$0xf]
  %v626 = vld [vmem:[%s623 + $0x8] sm:$0xf]
  %v627 = vld [vmem:[%s623 + $0xc] sm:$0xf]
  %v628 = vld [vmem:[%s623 + $0x10] sm:$0xf]
  %v629 = vld [vmem:[%s623 + $0x14] sm:$0xf]
  %v630 = vld [vmem:[%s623 + $0x18] sm:$0xf]
  %v631 = vld [vmem:[%s623 + $0x1c] sm:$0xf]
  %v632 = vld [vmem:[%s623 + $0x20] sm:$0xf]
  %v633 = vld [vmem:[%s623 + $0x24] sm:$0xf]
  %v634 = vld [vmem:[%s623 + $0x28] sm:$0xf]
  %v635 = vld [vmem:[%s623 + $0x2c] sm:$0xf]
  %v636 = vld [vmem:[%s623 + $0x30] sm:$0xf]
  %v637 = vld [vmem:[%s623 + $0x34] sm:$0xf]
  %v638 = vld [vmem:[%s623 + $0x38] sm:$0xf]
  %v639 = vld [vmem:[%s623 + $0x3c] sm:$0xf]
  %v656 = vunpack.c.l.b16 %v624
  %v657 = vunpack.c.l.b16 %v625
  %v658 = vunpack.c.l.b16 %v626
  %v659 = vunpack.c.l.b16 %v627
  %v660 = vunpack.c.l.b16 %v628
  %v661 = vunpack.c.l.b16 %v629
  %v662 = vunpack.c.l.b16 %v630
  %v663 = vunpack.c.l.b16 %v631
  %v664 = vunpack.c.l.b16 %v632
  %v665 = vunpack.c.l.b16 %v633
  %v666 = vunpack.c.l.b16 %v634
  %v667 = vunpack.c.l.b16 %v635
  %v668 = vunpack.c.l.b16 %v636
  %v669 = vunpack.c.l.b16 %v637
  %v670 = vunpack.c.l.b16 %v638
  %v671 = vunpack.c.l.b16 %v639
  %v672 = vpack.c.b16 %v657, %v656
  %v673 = vpack.c.b16 %v659, %v658
  %v674 = vpack.c.b16 %v661, %v660
  %v675 = vpack.c.b16 %v663, %v662
  %v676 = vpack.c.b16 %v665, %v664
  %v677 = vpack.c.b16 %v667, %v666
  %v678 = vpack.c.b16 %v669, %v668
  %v679 = vpack.c.b16 %v671, %v670
  %688 = vmatprep.subr.bf16.mxu0 0
  %689 = vmatpush1.bf16.msra.mxu0 %v672
  %690 = vmatprep.subr.bf16.mxu0 0
  %691 = vmatpush1.bf16.msra.mxu0 %v673
  %692 = vmatprep.subr.bf16.mxu0 0
  %693 = vmatpush1.bf16.msra.mxu0 %v674
  %694 = vmatprep.subr.bf16.mxu0 0
  %695 = vmatpush1.bf16.msra.mxu0 %v675
  %696 = vmatprep.subr.bf16.mxu0 0
  %697 = vmatpush1.bf16.msra.mxu0 %v676
  %698 = vmatprep.subr.bf16.mxu0 0
  %699 = vmatpush1.bf16.msra.mxu0 %v677
  %700 = vmatprep.subr.bf16.mxu0 0
  %701 = vmatpush1.bf16.msra.mxu0 %v678
  %702 = vmatprep.subr.bf16.mxu0 0
  %703 = vmatpush1.bf16.msra.mxu0 %v679
  %704 = vmatprep.subr.bf16.mxu0 0
  %705 = vmatpush1.bf16.msra.mxu0 0
  %706 = vmatprep.subr.bf16.mxu0 0
  %707 = vmatpush1.bf16.msra.mxu0 0
  %708 = vmatprep.subr.bf16.mxu0 0
  %709 = vmatpush1.bf16.msra.mxu0 0
  %710 = vmatprep.subr.bf16.mxu0 0
  %711 = vmatpush1.bf16.msra.mxu0 0
  %712 = vmatprep.subr.bf16.mxu0 0
  %713 = vmatpush1.bf16.msra.mxu0 0
  %714 = vmatprep.subr.bf16.mxu0 0
  %715 = vmatpush1.bf16.msra.mxu0 0
  %716 = vmatprep.subr.bf16.mxu0 0
  %717 = vmatpush1.bf16.msra.mxu0 0
  %718 = vmatprep.subr.bf16.mxu0 0
  %719 = vmatpush1.bf16.msra.mxu0 0
  %720 = vmatprep.mubr.bf16.mxu0 0
  %721 = vmatmul.mubr.bf16.gmra.mrb[0].mxu0 %v622
  %v722 = vpop.f32.mrb[0].mxu0
  %v723 = vadd.f32 0.0, %v722
  %v724 = vpop.f32.mrb[0].mxu0
  %v725 = vpop.f32.mrb[0].mxu0
  %v726 = vadd.f32 0.0, %v725
  %v727 = vpop.f32.mrb[0].mxu0
  %728 = vdwg.mxu0
  %v729 = vadd.f32 %v566, %v723
  %v730 = vadd.f32 %v567, %v726
  %s731 = scalar_lea.vmem %s0, 32
  %v732 = vld [vmem:[%s731] sm:$0xf]
  %v733 = vld [vmem:[%s731 + $0x4] sm:$0xf]
  %v736 = vunpack.c.l.b16 %v732
  %v737 = vunpack.c.l.b16 %v733
  %v738 = vpack.c.b16 %v737, %v736
  %740 = vmatprep.subr.bf16.mxu0 0
  %741 = vmatpush1.bf16.msra.mxu0 %v77
  %742 = vmatprep.subr.bf16.mxu0 0
  %743 = vmatpush1.bf16.msra.mxu0 %v78
  %744 = vmatprep.subr.bf16.mxu0 0
  %745 = vmatpush1.bf16.msra.mxu0 %v79
  %746 = vmatprep.subr.bf16.mxu0 0
  %747 = vmatpush1.bf16.msra.mxu0 %v80
  %748 = vmatprep.subr.bf16.mxu0 0
  %749 = vmatpush1.bf16.msra.mxu0 %v81
  %750 = vmatprep.subr.bf16.mxu0 0
  %751 = vmatpush1.bf16.msra.mxu0 %v82
  %752 = vmatprep.subr.bf16.mxu0 0
  %753 = vmatpush1.bf16.msra.mxu0 %v83
  %754 = vmatprep.subr.bf16.mxu0 0
  %755 = vmatpush1.bf16.msra.mxu0 %v84
  %756 = vmatprep.subr.bf16.mxu0 0
  %757 = vmatpush1.bf16.msra.mxu0 0
  %758 = vmatprep.subr.bf16.mxu0 0
  %759 = vmatpush1.bf16.msra.mxu0 0
  %760 = vmatprep.subr.bf16.mxu0 0
  %761 = vmatpush1.bf16.msra.mxu0 0
  %762 = vmatprep.subr.bf16.mxu0 0
  %763 = vmatpush1.bf16.msra.mxu0 0
  %764 = vmatprep.subr.bf16.mxu0 0
  %765 = vmatpush1.bf16.msra.mxu0 0
  %766 = vmatprep.subr.bf16.mxu0 0
  %767 = vmatpush1.bf16.msra.mxu0 0
  %768 = vmatprep.subr.bf16.mxu0 0
  %769 = vmatpush1.bf16.msra.mxu0 0
  %770 = vmatprep.subr.bf16.mxu0 0
  %771 = vmatpush1.bf16.msra.mxu0 0
  %772 = vmatprep.mubr.bf16.mxu0 0
  %773 = vmatmul.mubr.bf16.gmra.mrb[0].mxu0 %v738
  %v774 = vpop.f32.mrb[0].mxu0
  %v775 = vadd.f32 0.0, %v774
  %v776 = vpop.f32.mrb[0].mxu0
  %v777 = vpop.f32.mrb[0].mxu0
  %v778 = vadd.f32 0.0, %v777
  %v779 = vpop.f32.mrb[0].mxu0
  %780 = vdwg.mxu0
  %v781 = vmax.f32 %v775, 0.0
  %v782 = vmax.f32 %v778, 0.0
  %v783 = vsel %vm20, 1.0, %v781
  %v784 = vsel %vm20, 1.0, %v782
  %v785 = vpack.c.bf16 %v784, %v783
  %s786 = scalar_lea.vmem %s2, 256
  %v787 = vld [vmem:[%s786] sm:$0xf]
  %v788 = vld [vmem:[%s786 + $0x4] sm:$0xf]
  %v789 = vld [vmem:[%s786 + $0x8] sm:$0xf]
  %v790 = vld [vmem:[%s786 + $0xc] sm:$0xf]
  %v791 = vld [vmem:[%s786 + $0x10] sm:$0xf]
  %v792 = vld [vmem:[%s786 + $0x14] sm:$0xf]
  %v793 = vld [vmem:[%s786 + $0x18] sm:$0xf]
  %v794 = vld [vmem:[%s786 + $0x1c] sm:$0xf]
  %v795 = vld [vmem:[%s786 + $0x20] sm:$0xf]
  %v796 = vld [vmem:[%s786 + $0x24] sm:$0xf]
  %v797 = vld [vmem:[%s786 + $0x28] sm:$0xf]
  %v798 = vld [vmem:[%s786 + $0x2c] sm:$0xf]
  %v799 = vld [vmem:[%s786 + $0x30] sm:$0xf]
  %v800 = vld [vmem:[%s786 + $0x34] sm:$0xf]
  %v801 = vld [vmem:[%s786 + $0x38] sm:$0xf]
  %v802 = vld [vmem:[%s786 + $0x3c] sm:$0xf]
  %v819 = vunpack.c.l.b16 %v787
  %v820 = vunpack.c.l.b16 %v788
  %v821 = vunpack.c.l.b16 %v789
  %v822 = vunpack.c.l.b16 %v790
  %v823 = vunpack.c.l.b16 %v791
  %v824 = vunpack.c.l.b16 %v792
  %v825 = vunpack.c.l.b16 %v793
  %v826 = vunpack.c.l.b16 %v794
  %v827 = vunpack.c.l.b16 %v795
  %v828 = vunpack.c.l.b16 %v796
  %v829 = vunpack.c.l.b16 %v797
  %v830 = vunpack.c.l.b16 %v798
  %v831 = vunpack.c.l.b16 %v799
  %v832 = vunpack.c.l.b16 %v800
  %v833 = vunpack.c.l.b16 %v801
  %v834 = vunpack.c.l.b16 %v802
  %v835 = vpack.c.b16 %v820, %v819
  %v836 = vpack.c.b16 %v822, %v821
  %v837 = vpack.c.b16 %v824, %v823
  %v838 = vpack.c.b16 %v826, %v825
  %v839 = vpack.c.b16 %v828, %v827
  %v840 = vpack.c.b16 %v830, %v829
  %v841 = vpack.c.b16 %v832, %v831
  %v842 = vpack.c.b16 %v834, %v833
  %851 = vmatprep.subr.bf16.mxu0 0
  %852 = vmatpush1.bf16.msra.mxu0 %v835
  %853 = vmatprep.subr.bf16.mxu0 0
  %854 = vmatpush1.bf16.msra.mxu0 %v836
  %855 = vmatprep.subr.bf16.mxu0 0
  %856 = vmatpush1.bf16.msra.mxu0 %v837
  %857 = vmatprep.subr.bf16.mxu0 0
  %858 = vmatpush1.bf16.msra.mxu0 %v838
  %859 = vmatprep.subr.bf16.mxu0 0
  %860 = vmatpush1.bf16.msra.mxu0 %v839
  %861 = vmatprep.subr.bf16.mxu0 0
  %862 = vmatpush1.bf16.msra.mxu0 %v840
  %863 = vmatprep.subr.bf16.mxu0 0
  %864 = vmatpush1.bf16.msra.mxu0 %v841
  %865 = vmatprep.subr.bf16.mxu0 0
  %866 = vmatpush1.bf16.msra.mxu0 %v842
  %867 = vmatprep.subr.bf16.mxu0 0
  %868 = vmatpush1.bf16.msra.mxu0 0
  %869 = vmatprep.subr.bf16.mxu0 0
  %870 = vmatpush1.bf16.msra.mxu0 0
  %871 = vmatprep.subr.bf16.mxu0 0
  %872 = vmatpush1.bf16.msra.mxu0 0
  %873 = vmatprep.subr.bf16.mxu0 0
  %874 = vmatpush1.bf16.msra.mxu0 0
  %875 = vmatprep.subr.bf16.mxu0 0
  %876 = vmatpush1.bf16.msra.mxu0 0
  %877 = vmatprep.subr.bf16.mxu0 0
  %878 = vmatpush1.bf16.msra.mxu0 0
  %879 = vmatprep.subr.bf16.mxu0 0
  %880 = vmatpush1.bf16.msra.mxu0 0
  %881 = vmatprep.subr.bf16.mxu0 0
  %882 = vmatpush1.bf16.msra.mxu0 0
  %883 = vmatprep.mubr.bf16.mxu0 0
  %884 = vmatmul.mubr.bf16.gmra.mrb[0].mxu0 %v785
  %v885 = vpop.f32.mrb[0].mxu0
  %v886 = vadd.f32 0.0, %v885
  %v887 = vpop.f32.mrb[0].mxu0
  %v888 = vpop.f32.mrb[0].mxu0
  %v889 = vadd.f32 0.0, %v888
  %v890 = vpop.f32.mrb[0].mxu0
  %891 = vdwg.mxu0
  %v892 = vadd.f32 %v729, %v886
  %v893 = vadd.f32 %v730, %v889
  %s894 = scalar_lea.vmem %s0, 40
  %v895 = vld [vmem:[%s894] sm:$0xf]
  %v896 = vld [vmem:[%s894 + $0x4] sm:$0xf]
  %v899 = vunpack.c.l.b16 %v895
  %v900 = vunpack.c.l.b16 %v896
  %v901 = vpack.c.b16 %v900, %v899
  %903 = vmatprep.subr.bf16.mxu0 0
  %904 = vmatpush1.bf16.msra.mxu0 %v77
  %905 = vmatprep.subr.bf16.mxu0 0
  %906 = vmatpush1.bf16.msra.mxu0 %v78
  %907 = vmatprep.subr.bf16.mxu0 0
  %908 = vmatpush1.bf16.msra.mxu0 %v79
  %909 = vmatprep.subr.bf16.mxu0 0
  %910 = vmatpush1.bf16.msra.mxu0 %v80
  %911 = vmatprep.subr.bf16.mxu0 0
  %912 = vmatpush1.bf16.msra.mxu0 %v81
  %913 = vmatprep.subr.bf16.mxu0 0
  %914 = vmatpush1.bf16.msra.mxu0 %v82
  %915 = vmatprep.subr.bf16.mxu0 0
  %916 = vmatpush1.bf16.msra.mxu0 %v83
  %917 = vmatprep.subr.bf16.mxu0 0
  %918 = vmatpush1.bf16.msra.mxu0 %v84
  %919 = vmatprep.subr.bf16.mxu0 0
  %920 = vmatpush1.bf16.msra.mxu0 0
  %921 = vmatprep.subr.bf16.mxu0 0
  %922 = vmatpush1.bf16.msra.mxu0 0
  %923 = vmatprep.subr.bf16.mxu0 0
  %924 = vmatpush1.bf16.msra.mxu0 0
  %925 = vmatprep.subr.bf16.mxu0 0
  %926 = vmatpush1.bf16.msra.mxu0 0
  %927 = vmatprep.subr.bf16.mxu0 0
  %928 = vmatpush1.bf16.msra.mxu0 0
  %929 = vmatprep.subr.bf16.mxu0 0
  %930 = vmatpush1.bf16.msra.mxu0 0
  %931 = vmatprep.subr.bf16.mxu0 0
  %932 = vmatpush1.bf16.msra.mxu0 0
  %933 = vmatprep.subr.bf16.mxu0 0
  %934 = vmatpush1.bf16.msra.mxu0 0
  %935 = vmatprep.mubr.bf16.mxu0 0
  %936 = vmatmul.mubr.bf16.gmra.mrb[0].mxu0 %v901
  %v937 = vpop.f32.mrb[0].mxu0
  %v938 = vadd.f32 0.0, %v937
  %v939 = vpop.f32.mrb[0].mxu0
  %v940 = vpop.f32.mrb[0].mxu0
  %v941 = vadd.f32 0.0, %v940
  %v942 = vpop.f32.mrb[0].mxu0
  %943 = vdwg.mxu0
  %v944 = vmax.f32 %v938, 0.0
  %v945 = vmax.f32 %v941, 0.0
  %v946 = vsel %vm20, 1.0, %v944
  %v947 = vsel %vm20, 1.0, %v945
  %v948 = vpack.c.bf16 %v947, %v946
  %s949 = scalar_lea.vmem %s2, 320
  %v950 = vld [vmem:[%s949] sm:$0xf]
  %v951 = vld [vmem:[%s949 + $0x4] sm:$0xf]
  %v952 = vld [vmem:[%s949 + $0x8] sm:$0xf]
  %v953 = vld [vmem:[%s949 + $0xc] sm:$0xf]
  %v954 = vld [vmem:[%s949 + $0x10] sm:$0xf]
  %v955 = vld [vmem:[%s949 + $0x14] sm:$0xf]
  %v956 = vld [vmem:[%s949 + $0x18] sm:$0xf]
  %v957 = vld [vmem:[%s949 + $0x1c] sm:$0xf]
  %v958 = vld [vmem:[%s949 + $0x20] sm:$0xf]
  %v959 = vld [vmem:[%s949 + $0x24] sm:$0xf]
  %v960 = vld [vmem:[%s949 + $0x28] sm:$0xf]
  %v961 = vld [vmem:[%s949 + $0x2c] sm:$0xf]
  %v962 = vld [vmem:[%s949 + $0x30] sm:$0xf]
  %v963 = vld [vmem:[%s949 + $0x34] sm:$0xf]
  %v964 = vld [vmem:[%s949 + $0x38] sm:$0xf]
  %v965 = vld [vmem:[%s949 + $0x3c] sm:$0xf]
  %v982 = vunpack.c.l.b16 %v950
  %v983 = vunpack.c.l.b16 %v951
  %v984 = vunpack.c.l.b16 %v952
  %v985 = vunpack.c.l.b16 %v953
  %v986 = vunpack.c.l.b16 %v954
  %v987 = vunpack.c.l.b16 %v955
  %v988 = vunpack.c.l.b16 %v956
  %v989 = vunpack.c.l.b16 %v957
  %v990 = vunpack.c.l.b16 %v958
  %v991 = vunpack.c.l.b16 %v959
  %v992 = vunpack.c.l.b16 %v960
  %v993 = vunpack.c.l.b16 %v961
  %v994 = vunpack.c.l.b16 %v962
  %v995 = vunpack.c.l.b16 %v963
  %v996 = vunpack.c.l.b16 %v964
  %v997 = vunpack.c.l.b16 %v965
  %v998 = vpack.c.b16 %v983, %v982
  %v999 = vpack.c.b16 %v985, %v984
  %v1000 = vpack.c.b16 %v987, %v986
  %v1001 = vpack.c.b16 %v989, %v988
  %v1002 = vpack.c.b16 %v991, %v990
  %v1003 = vpack.c.b16 %v993, %v992
  %v1004 = vpack.c.b16 %v995, %v994
  %v1005 = vpack.c.b16 %v997, %v996
  %1014 = vmatprep.subr.bf16.mxu0 0
  %1015 = vmatpush1.bf16.msra.mxu0 %v998
  %1016 = vmatprep.subr.bf16.mxu0 0
  %1017 = vmatpush1.bf16.msra.mxu0 %v999
  %1018 = vmatprep.subr.bf16.mxu0 0
  %1019 = vmatpush1.bf16.msra.mxu0 %v1000
  %1020 = vmatprep.subr.bf16.mxu0 0
  %1021 = vmatpush1.bf16.msra.mxu0 %v1001
  %1022 = vmatprep.subr.bf16.mxu0 0
  %1023 = vmatpush1.bf16.msra.mxu0 %v1002
  %1024 = vmatprep.subr.bf16.mxu0 0
  %1025 = vmatpush1.bf16.msra.mxu0 %v1003
  %1026 = vmatprep.subr.bf16.mxu0 0
  %1027 = vmatpush1.bf16.msra.mxu0 %v1004
  %1028 = vmatprep.subr.bf16.mxu0 0
  %1029 = vmatpush1.bf16.msra.mxu0 %v1005
  %1030 = vmatprep.subr.bf16.mxu0 0
  %1031 = vmatpush1.bf16.msra.mxu0 0
  %1032 = vmatprep.subr.bf16.mxu0 0
  %1033 = vmatpush1.bf16.msra.mxu0 0
  %1034 = vmatprep.subr.bf16.mxu0 0
  %1035 = vmatpush1.bf16.msra.mxu0 0
  %1036 = vmatprep.subr.bf16.mxu0 0
  %1037 = vmatpush1.bf16.msra.mxu0 0
  %1038 = vmatprep.subr.bf16.mxu0 0
  %1039 = vmatpush1.bf16.msra.mxu0 0
  %1040 = vmatprep.subr.bf16.mxu0 0
  %1041 = vmatpush1.bf16.msra.mxu0 0
  %1042 = vmatprep.subr.bf16.mxu0 0
  %1043 = vmatpush1.bf16.msra.mxu0 0
  %1044 = vmatprep.subr.bf16.mxu0 0
  %1045 = vmatpush1.bf16.msra.mxu0 0
  %1046 = vmatprep.mubr.bf16.mxu0 0
  %1047 = vmatmul.mubr.bf16.gmra.mrb[0].mxu0 %v948
  %v1048 = vpop.f32.mrb[0].mxu0
  %v1049 = vadd.f32 0.0, %v1048
  %v1050 = vpop.f32.mrb[0].mxu0
  %v1051 = vpop.f32.mrb[0].mxu0
  %v1052 = vadd.f32 0.0, %v1051
  %v1053 = vpop.f32.mrb[0].mxu0
  %1054 = vdwg.mxu0
  %v1055 = vadd.f32 %v892, %v1049
  %v1056 = vadd.f32 %v893, %v1052
  %s1057 = scalar_lea.vmem %s0, 48
  %v1058 = vld [vmem:[%s1057] sm:$0xf]
  %v1059 = vld [vmem:[%s1057 + $0x4] sm:$0xf]
  %v1062 = vunpack.c.l.b16 %v1058
  %v1063 = vunpack.c.l.b16 %v1059
  %v1064 = vpack.c.b16 %v1063, %v1062
  %1066 = vmatprep.subr.bf16.mxu0 0
  %1067 = vmatpush1.bf16.msra.mxu0 %v77
  %1068 = vmatprep.subr.bf16.mxu0 0
  %1069 = vmatpush1.bf16.msra.mxu0 %v78
  %1070 = vmatprep.subr.bf16.mxu0 0
  %1071 = vmatpush1.bf16.msra.mxu0 %v79
  %1072 = vmatprep.subr.bf16.mxu0 0
  %1073 = vmatpush1.bf16.msra.mxu0 %v80
  %1074 = vmatprep.subr.bf16.mxu0 0
  %1075 = vmatpush1.bf16.msra.mxu0 %v81
  %1076 = vmatprep.subr.bf16.mxu0 0
  %1077 = vmatpush1.bf16.msra.mxu0 %v82
  %1078 = vmatprep.subr.bf16.mxu0 0
  %1079 = vmatpush1.bf16.msra.mxu0 %v83
  %1080 = vmatprep.subr.bf16.mxu0 0
  %1081 = vmatpush1.bf16.msra.mxu0 %v84
  %1082 = vmatprep.subr.bf16.mxu0 0
  %1083 = vmatpush1.bf16.msra.mxu0 0
  %1084 = vmatprep.subr.bf16.mxu0 0
  %1085 = vmatpush1.bf16.msra.mxu0 0
  %1086 = vmatprep.subr.bf16.mxu0 0
  %1087 = vmatpush1.bf16.msra.mxu0 0
  %1088 = vmatprep.subr.bf16.mxu0 0
  %1089 = vmatpush1.bf16.msra.mxu0 0
  %1090 = vmatprep.subr.bf16.mxu0 0
  %1091 = vmatpush1.bf16.msra.mxu0 0
  %1092 = vmatprep.subr.bf16.mxu0 0
  %1093 = vmatpush1.bf16.msra.mxu0 0
  %1094 = vmatprep.subr.bf16.mxu0 0
  %1095 = vmatpush1.bf16.msra.mxu0 0
  %1096 = vmatprep.subr.bf16.mxu0 0
  %1097 = vmatpush1.bf16.msra.mxu0 0
  %1098 = vmatprep.mubr.bf16.mxu0 0
  %1099 = vmatmul.mubr.bf16.gmra.mrb[0].mxu0 %v1064
  %v1100 = vpop.f32.mrb[0].mxu0
  %v1101 = vadd.f32 0.0, %v1100
  %v1102 = vpop.f32.mrb[0].mxu0
  %v1103 = vpop.f32.mrb[0].mxu0
  %v1104 = vadd.f32 0.0, %v1103
  %v1105 = vpop.f32.mrb[0].mxu0
  %1106 = vdwg.mxu0
  %v1107 = vmax.f32 %v1101, 0.0
  %v1108 = vmax.f32 %v1104, 0.0
  %v1109 = vsel %vm20, 1.0, %v1107
  %v1110 = vsel %vm20, 1.0, %v1108
  %v1111 = vpack.c.bf16 %v1110, %v1109
  %s1112 = scalar_lea.vmem %s2, 384
  %v1113 = vld [vmem:[%s1112] sm:$0xf]
  %v1114 = vld [vmem:[%s1112 + $0x4] sm:$0xf]
  %v1115 = vld [vmem:[%s1112 + $0x8] sm:$0xf]
  %v1116 = vld [vmem:[%s1112 + $0xc] sm:$0xf]
  %v1117 = vld [vmem:[%s1112 + $0x10] sm:$0xf]
  %v1118 = vld [vmem:[%s1112 + $0x14] sm:$0xf]
  %v1119 = vld [vmem:[%s1112 + $0x18] sm:$0xf]
  %v1120 = vld [vmem:[%s1112 + $0x1c] sm:$0xf]
  %v1121 = vld [vmem:[%s1112 + $0x20] sm:$0xf]
  %v1122 = vld [vmem:[%s1112 + $0x24] sm:$0xf]
  %v1123 = vld [vmem:[%s1112 + $0x28] sm:$0xf]
  %v1124 = vld [vmem:[%s1112 + $0x2c] sm:$0xf]
  %v1125 = vld [vmem:[%s1112 + $0x30] sm:$0xf]
  %v1126 = vld [vmem:[%s1112 + $0x34] sm:$0xf]
  %v1127 = vld [vmem:[%s1112 + $0x38] sm:$0xf]
  %v1128 = vld [vmem:[%s1112 + $0x3c] sm:$0xf]
  %v1145 = vunpack.c.l.b16 %v1113
  %v1146 = vunpack.c.l.b16 %v1114
  %v1147 = vunpack.c.l.b16 %v1115
  %v1148 = vunpack.c.l.b16 %v1116
  %v1149 = vunpack.c.l.b16 %v1117
  %v1150 = vunpack.c.l.b16 %v1118
  %v1151 = vunpack.c.l.b16 %v1119
  %v1152 = vunpack.c.l.b16 %v1120
  %v1153 = vunpack.c.l.b16 %v1121
  %v1154 = vunpack.c.l.b16 %v1122
  %v1155 = vunpack.c.l.b16 %v1123
  %v1156 = vunpack.c.l.b16 %v1124
  %v1157 = vunpack.c.l.b16 %v1125
  %v1158 = vunpack.c.l.b16 %v1126
  %v1159 = vunpack.c.l.b16 %v1127
  %v1160 = vunpack.c.l.b16 %v1128
  %v1161 = vpack.c.b16 %v1146, %v1145
  %v1162 = vpack.c.b16 %v1148, %v1147
  %v1163 = vpack.c.b16 %v1150, %v1149
  %v1164 = vpack.c.b16 %v1152, %v1151
  %v1165 = vpack.c.b16 %v1154, %v1153
  %v1166 = vpack.c.b16 %v1156, %v1155
  %v1167 = vpack.c.b16 %v1158, %v1157
  %v1168 = vpack.c.b16 %v1160, %v1159
  %1177 = vmatprep.subr.bf16.mxu0 0
  %1178 = vmatpush1.bf16.msra.mxu0 %v1161
  %1179 = vmatprep.subr.bf16.mxu0 0
  %1180 = vmatpush1.bf16.msra.mxu0 %v1162
  %1181 = vmatprep.subr.bf16.mxu0 0
  %1182 = vmatpush1.bf16.msra.mxu0 %v1163
  %1183 = vmatprep.subr.bf16.mxu0 0
  %1184 = vmatpush1.bf16.msra.mxu0 %v1164
  %1185 = vmatprep.subr.bf16.mxu0 0
  %1186 = vmatpush1.bf16.msra.mxu0 %v1165
  %1187 = vmatprep.subr.bf16.mxu0 0
  %1188 = vmatpush1.bf16.msra.mxu0 %v1166
  %1189 = vmatprep.subr.bf16.mxu0 0
  %1190 = vmatpush1.bf16.msra.mxu0 %v1167
  %1191 = vmatprep.subr.bf16.mxu0 0
  %1192 = vmatpush1.bf16.msra.mxu0 %v1168
  %1193 = vmatprep.subr.bf16.mxu0 0
  %1194 = vmatpush1.bf16.msra.mxu0 0
  %1195 = vmatprep.subr.bf16.mxu0 0
  %1196 = vmatpush1.bf16.msra.mxu0 0
  %1197 = vmatprep.subr.bf16.mxu0 0
  %1198 = vmatpush1.bf16.msra.mxu0 0
  %1199 = vmatprep.subr.bf16.mxu0 0
  %1200 = vmatpush1.bf16.msra.mxu0 0
  %1201 = vmatprep.subr.bf16.mxu0 0
  %1202 = vmatpush1.bf16.msra.mxu0 0
  %1203 = vmatprep.subr.bf16.mxu0 0
  %1204 = vmatpush1.bf16.msra.mxu0 0
  %1205 = vmatprep.subr.bf16.mxu0 0
  %1206 = vmatpush1.bf16.msra.mxu0 0
  %1207 = vmatprep.subr.bf16.mxu0 0
  %1208 = vmatpush1.bf16.msra.mxu0 0
  %1209 = vmatprep.mubr.bf16.mxu0 0
  %1210 = vmatmul.mubr.bf16.gmra.mrb[0].mxu0 %v1111
  %v1211 = vpop.f32.mrb[0].mxu0
  %v1212 = vadd.f32 0.0, %v1211
  %v1213 = vpop.f32.mrb[0].mxu0
  %v1214 = vpop.f32.mrb[0].mxu0
  %v1215 = vadd.f32 0.0, %v1214
  %v1216 = vpop.f32.mrb[0].mxu0
  %1217 = vdwg.mxu0
  %v1218 = vadd.f32 %v1055, %v1212
  %v1219 = vadd.f32 %v1056, %v1215
  %s1220 = scalar_lea.vmem %s0, 56
  %v1221 = vld [vmem:[%s1220] sm:$0xf]
  %v1222 = vld [vmem:[%s1220 + $0x4] sm:$0xf]
  %v1225 = vunpack.c.l.b16 %v1221
  %v1226 = vunpack.c.l.b16 %v1222
  %v1227 = vpack.c.b16 %v1226, %v1225
  %1229 = vmatprep.subr.bf16.mxu0 0
  %1230 = vmatpush1.bf16.msra.mxu0 %v77
  %1231 = vmatprep.subr.bf16.mxu0 0
  %1232 = vmatpush1.bf16.msra.mxu0 %v78
  %1233 = vmatprep.subr.bf16.mxu0 0
  %1234 = vmatpush1.bf16.msra.mxu0 %v79
  %1235 = vmatprep.subr.bf16.mxu0 0
  %1236 = vmatpush1.bf16.msra.mxu0 %v80
  %1237 = vmatprep.subr.bf16.mxu0 0
  %1238 = vmatpush1.bf16.msra.mxu0 %v81
  %1239 = vmatprep.subr.bf16.mxu0 0
  %1240 = vmatpush1.bf16.msra.mxu0 %v82
  %1241 = vmatprep.subr.bf16.mxu0 0
  %1242 = vmatpush1.bf16.msra.mxu0 %v83
  %1243 = vmatprep.subr.bf16.mxu0 0
  %1244 = vmatpush1.bf16.msra.mxu0 %v84
  %1245 = vmatprep.subr.bf16.mxu0 0
  %1246 = vmatpush1.bf16.msra.mxu0 0
  %1247 = vmatprep.subr.bf16.mxu0 0
  %1248 = vmatpush1.bf16.msra.mxu0 0
  %1249 = vmatprep.subr.bf16.mxu0 0
  %1250 = vmatpush1.bf16.msra.mxu0 0
  %1251 = vmatprep.subr.bf16.mxu0 0
  %1252 = vmatpush1.bf16.msra.mxu0 0
  %1253 = vmatprep.subr.bf16.mxu0 0
  %1254 = vmatpush1.bf16.msra.mxu0 0
  %1255 = vmatprep.subr.bf16.mxu0 0
  %1256 = vmatpush1.bf16.msra.mxu0 0
  %1257 = vmatprep.subr.bf16.mxu0 0
  %1258 = vmatpush1.bf16.msra.mxu0 0
  %1259 = vmatprep.subr.bf16.mxu0 0
  %1260 = vmatpush1.bf16.msra.mxu0 0
  %1261 = vmatprep.mubr.bf16.mxu0 0
  %1262 = vmatmul.mubr.bf16.gmra.mrb[0].mxu0 %v1227
  %v1263 = vpop.f32.mrb[0].mxu0
  %v1264 = vadd.f32 0.0, %v1263
  %v1265 = vpop.f32.mrb[0].mxu0
  %v1266 = vpop.f32.mrb[0].mxu0
  %v1267 = vadd.f32 0.0, %v1266
  %v1268 = vpop.f32.mrb[0].mxu0
  %1269 = vdwg.mxu0
  %v1270 = vmax.f32 %v1264, 0.0
  %v1271 = vmax.f32 %v1267, 0.0
  %v1272 = vsel %vm20, 1.0, %v1270
  %v1273 = vsel %vm20, 1.0, %v1271
  %v1274 = vpack.c.bf16 %v1273, %v1272
  %s1275 = scalar_lea.vmem %s2, 448
  %v1276 = vld [vmem:[%s1275] sm:$0xf]
  %v1277 = vld [vmem:[%s1275 + $0x4] sm:$0xf]
  %v1278 = vld [vmem:[%s1275 + $0x8] sm:$0xf]
  %v1279 = vld [vmem:[%s1275 + $0xc] sm:$0xf]
  %v1280 = vld [vmem:[%s1275 + $0x10] sm:$0xf]
  %v1281 = vld [vmem:[%s1275 + $0x14] sm:$0xf]
  %v1282 = vld [vmem:[%s1275 + $0x18] sm:$0xf]
  %v1283 = vld [vmem:[%s1275 + $0x1c] sm:$0xf]
  %v1284 = vld [vmem:[%s1275 + $0x20] sm:$0xf]
  %v1285 = vld [vmem:[%s1275 + $0x24] sm:$0xf]
  %v1286 = vld [vmem:[%s1275 + $0x28] sm:$0xf]
  %v1287 = vld [vmem:[%s1275 + $0x2c] sm:$0xf]
  %v1288 = vld [vmem:[%s1275 + $0x30] sm:$0xf]
  %v1289 = vld [vmem:[%s1275 + $0x34] sm:$0xf]
  %v1290 = vld [vmem:[%s1275 + $0x38] sm:$0xf]
  %v1291 = vld [vmem:[%s1275 + $0x3c] sm:$0xf]
  %v1308 = vunpack.c.l.b16 %v1276
  %v1309 = vunpack.c.l.b16 %v1277
  %v1310 = vunpack.c.l.b16 %v1278
  %v1311 = vunpack.c.l.b16 %v1279
  %v1312 = vunpack.c.l.b16 %v1280
  %v1313 = vunpack.c.l.b16 %v1281
  %v1314 = vunpack.c.l.b16 %v1282
  %v1315 = vunpack.c.l.b16 %v1283
  %v1316 = vunpack.c.l.b16 %v1284
  %v1317 = vunpack.c.l.b16 %v1285
  %v1318 = vunpack.c.l.b16 %v1286
  %v1319 = vunpack.c.l.b16 %v1287
  %v1320 = vunpack.c.l.b16 %v1288
  %v1321 = vunpack.c.l.b16 %v1289
  %v1322 = vunpack.c.l.b16 %v1290
  %v1323 = vunpack.c.l.b16 %v1291
  %v1324 = vpack.c.b16 %v1309, %v1308
  %v1325 = vpack.c.b16 %v1311, %v1310
  %v1326 = vpack.c.b16 %v1313, %v1312
  %v1327 = vpack.c.b16 %v1315, %v1314
  %v1328 = vpack.c.b16 %v1317, %v1316
  %v1329 = vpack.c.b16 %v1319, %v1318
  %v1330 = vpack.c.b16 %v1321, %v1320
  %v1331 = vpack.c.b16 %v1323, %v1322
  %1340 = vmatprep.subr.bf16.mxu0 0
  %1341 = vmatpush1.bf16.msra.mxu0 %v1324
  %1342 = vmatprep.subr.bf16.mxu0 0
  %1343 = vmatpush1.bf16.msra.mxu0 %v1325
  %1344 = vmatprep.subr.bf16.mxu0 0
  %1345 = vmatpush1.bf16.msra.mxu0 %v1326
  %1346 = vmatprep.subr.bf16.mxu0 0
  %1347 = vmatpush1.bf16.msra.mxu0 %v1327
  %1348 = vmatprep.subr.bf16.mxu0 0
  %1349 = vmatpush1.bf16.msra.mxu0 %v1328
  %1350 = vmatprep.subr.bf16.mxu0 0
  %1351 = vmatpush1.bf16.msra.mxu0 %v1329
  %1352 = vmatprep.subr.bf16.mxu0 0
  %1353 = vmatpush1.bf16.msra.mxu0 %v1330
  %1354 = vmatprep.subr.bf16.mxu0 0
  %1355 = vmatpush1.bf16.msra.mxu0 %v1331
  %1356 = vmatprep.subr.bf16.mxu0 0
  %1357 = vmatpush1.bf16.msra.mxu0 0
  %1358 = vmatprep.subr.bf16.mxu0 0
  %1359 = vmatpush1.bf16.msra.mxu0 0
  %1360 = vmatprep.subr.bf16.mxu0 0
  %1361 = vmatpush1.bf16.msra.mxu0 0
  %1362 = vmatprep.subr.bf16.mxu0 0
  %1363 = vmatpush1.bf16.msra.mxu0 0
  %1364 = vmatprep.subr.bf16.mxu0 0
  %1365 = vmatpush1.bf16.msra.mxu0 0
  %1366 = vmatprep.subr.bf16.mxu0 0
  %1367 = vmatpush1.bf16.msra.mxu0 0
  %1368 = vmatprep.subr.bf16.mxu0 0
  %1369 = vmatpush1.bf16.msra.mxu0 0
  %1370 = vmatprep.subr.bf16.mxu0 0
  %1371 = vmatpush1.bf16.msra.mxu0 0
  %1372 = vmatprep.mubr.bf16.mxu0 0
  %1373 = vmatmul.mubr.bf16.gmra.mrb[0].mxu0 %v1274
  %v1374 = vpop.f32.mrb[0].mxu0
  %v1375 = vadd.f32 0.0, %v1374
  %v1376 = vpop.f32.mrb[0].mxu0
  %v1377 = vpop.f32.mrb[0].mxu0
  %v1378 = vadd.f32 0.0, %v1377
  %v1379 = vpop.f32.mrb[0].mxu0
  %1380 = vdwg.mxu0
  %v1381 = vadd.f32 %v1218, %v1375
  %v1382 = vadd.f32 %v1219, %v1378
  %s1383 = scalar_lea.vmem %s0, 64
  %v1384 = vld [vmem:[%s1383] sm:$0xf]
  %v1385 = vld [vmem:[%s1383 + $0x4] sm:$0xf]
  %v1388 = vunpack.c.l.b16 %v1384
  %v1389 = vunpack.c.l.b16 %v1385
  %v1390 = vpack.c.b16 %v1389, %v1388
  %1392 = vmatprep.subr.bf16.mxu0 0
  %1393 = vmatpush1.bf16.msra.mxu0 %v77
  %1394 = vmatprep.subr.bf16.mxu0 0
  %1395 = vmatpush1.bf16.msra.mxu0 %v78
  %1396 = vmatprep.subr.bf16.mxu0 0
  %1397 = vmatpush1.bf16.msra.mxu0 %v79
  %1398 = vmatprep.subr.bf16.mxu0 0
  %1399 = vmatpush1.bf16.msra.mxu0 %v80
  %1400 = vmatprep.subr.bf16.mxu0 0
  %1401 = vmatpush1.bf16.msra.mxu0 %v81
  %1402 = vmatprep.subr.bf16.mxu0 0
  %1403 = vmatpush1.bf16.msra.mxu0 %v82
  %1404 = vmatprep.subr.bf16.mxu0 0
  %1405 = vmatpush1.bf16.msra.mxu0 %v83
  %1406 = vmatprep.subr.bf16.mxu0 0
  %1407 = vmatpush1.bf16.msra.mxu0 %v84
  %1408 = vmatprep.subr.bf16.mxu0 0
  %1409 = vmatpush1.bf16.msra.mxu0 0
  %1410 = vmatprep.subr.bf16.mxu0 0
  %1411 = vmatpush1.bf16.msra.mxu0 0
  %1412 = vmatprep.subr.bf16.mxu0 0
  %1413 = vmatpush1.bf16.msra.mxu0 0
  %1414 = vmatprep.subr.bf16.mxu0 0
  %1415 = vmatpush1.bf16.msra.mxu0 0
  %1416 = vmatprep.subr.bf16.mxu0 0
  %1417 = vmatpush1.bf16.msra.mxu0 0
  %1418 = vmatprep.subr.bf16.mxu0 0
  %1419 = vmatpush1.bf16.msra.mxu0 0
  %1420 = vmatprep.subr.bf16.mxu0 0
  %1421 = vmatpush1.bf16.msra.mxu0 0
  %1422 = vmatprep.subr.bf16.mxu0 0
  %1423 = vmatpush1.bf16.msra.mxu0 0
  %1424 = vmatprep.mubr.bf16.mxu0 0
  %1425 = vmatmul.mubr.bf16.gmra.mrb[0].mxu0 %v1390
  %v1426 = vpop.f32.mrb[0].mxu0
  %v1427 = vadd.f32 0.0, %v1426
  %v1428 = vpop.f32.mrb[0].mxu0
  %v1429 = vpop.f32.mrb[0].mxu0
  %v1430 = vadd.f32 0.0, %v1429
  %v1431 = vpop.f32.mrb[0].mxu0
  %1432 = vdwg.mxu0
  %v1433 = vmax.f32 %v1427, 0.0
  %v1434 = vmax.f32 %v1430, 0.0
  %v1435 = vsel %vm20, 1.0, %v1433
  %v1436 = vsel %vm20, 1.0, %v1434
  %v1437 = vpack.c.bf16 %v1436, %v1435
  %s1438 = scalar_lea.vmem %s2, 512
  %v1439 = vld [vmem:[%s1438] sm:$0xf]
  %v1440 = vld [vmem:[%s1438 + $0x4] sm:$0xf]
  %v1441 = vld [vmem:[%s1438 + $0x8] sm:$0xf]
  %v1442 = vld [vmem:[%s1438 + $0xc] sm:$0xf]
  %v1443 = vld [vmem:[%s1438 + $0x10] sm:$0xf]
  %v1444 = vld [vmem:[%s1438 + $0x14] sm:$0xf]
  %v1445 = vld [vmem:[%s1438 + $0x18] sm:$0xf]
  %v1446 = vld [vmem:[%s1438 + $0x1c] sm:$0xf]
  %v1447 = vld [vmem:[%s1438 + $0x20] sm:$0xf]
  %v1448 = vld [vmem:[%s1438 + $0x24] sm:$0xf]
  %v1449 = vld [vmem:[%s1438 + $0x28] sm:$0xf]
  %v1450 = vld [vmem:[%s1438 + $0x2c] sm:$0xf]
  %v1451 = vld [vmem:[%s1438 + $0x30] sm:$0xf]
  %v1452 = vld [vmem:[%s1438 + $0x34] sm:$0xf]
  %v1453 = vld [vmem:[%s1438 + $0x38] sm:$0xf]
  %v1454 = vld [vmem:[%s1438 + $0x3c] sm:$0xf]
  %v1471 = vunpack.c.l.b16 %v1439
  %v1472 = vunpack.c.l.b16 %v1440
  %v1473 = vunpack.c.l.b16 %v1441
  %v1474 = vunpack.c.l.b16 %v1442
  %v1475 = vunpack.c.l.b16 %v1443
  %v1476 = vunpack.c.l.b16 %v1444
  %v1477 = vunpack.c.l.b16 %v1445
  %v1478 = vunpack.c.l.b16 %v1446
  %v1479 = vunpack.c.l.b16 %v1447
  %v1480 = vunpack.c.l.b16 %v1448
  %v1481 = vunpack.c.l.b16 %v1449
  %v1482 = vunpack.c.l.b16 %v1450
  %v1483 = vunpack.c.l.b16 %v1451
  %v1484 = vunpack.c.l.b16 %v1452
  %v1485 = vunpack.c.l.b16 %v1453
  %v1486 = vunpack.c.l.b16 %v1454
  %v1487 = vpack.c.b16 %v1472, %v1471
  %v1488 = vpack.c.b16 %v1474, %v1473
  %v1489 = vpack.c.b16 %v1476, %v1475
  %v1490 = vpack.c.b16 %v1478, %v1477
  %v1491 = vpack.c.b16 %v1480, %v1479
  %v1492 = vpack.c.b16 %v1482, %v1481
  %v1493 = vpack.c.b16 %v1484, %v1483
  %v1494 = vpack.c.b16 %v1486, %v1485
  %1503 = vmatprep.subr.bf16.mxu0 0
  %1504 = vmatpush1.bf16.msra.mxu0 %v1487
  %1505 = vmatprep.subr.bf16.mxu0 0
  %1506 = vmatpush1.bf16.msra.mxu0 %v1488
  %1507 = vmatprep.subr.bf16.mxu0 0
  %1508 = vmatpush1.bf16.msra.mxu0 %v1489
  %1509 = vmatprep.subr.bf16.mxu0 0
  %1510 = vmatpush1.bf16.msra.mxu0 %v1490
  %1511 = vmatprep.subr.bf16.mxu0 0
  %1512 = vmatpush1.bf16.msra.mxu0 %v1491
  %1513 = vmatprep.subr.bf16.mxu0 0
  %1514 = vmatpush1.bf16.msra.mxu0 %v1492
  %1515 = vmatprep.subr.bf16.mxu0 0
  %1516 = vmatpush1.bf16.msra.mxu0 %v1493
  %1517 = vmatprep.subr.bf16.mxu0 0
  %1518 = vmatpush1.bf16.msra.mxu0 %v1494
  %1519 = vmatprep.subr.bf16.mxu0 0
  %1520 = vmatpush1.bf16.msra.mxu0 0
  %1521 = vmatprep.subr.bf16.mxu0 0
  %1522 = vmatpush1.bf16.msra.mxu0 0
  %1523 = vmatprep.subr.bf16.mxu0 0
  %1524 = vmatpush1.bf16.msra.mxu0 0
  %1525 = vmatprep.subr.bf16.mxu0 0
  %1526 = vmatpush1.bf16.msra.mxu0 0
  %1527 = vmatprep.subr.bf16.mxu0 0
  %1528 = vmatpush1.bf16.msra.mxu0 0
  %1529 = vmatprep.subr.bf16.mxu0 0
  %1530 = vmatpush1.bf16.msra.mxu0 0
  %1531 = vmatprep.subr.bf16.mxu0 0
  %1532 = vmatpush1.bf16.msra.mxu0 0
  %1533 = vmatprep.subr.bf16.mxu0 0
  %1534 = vmatpush1.bf16.msra.mxu0 0
  %1535 = vmatprep.mubr.bf16.mxu0 0
  %1536 = vmatmul.mubr.bf16.gmra.mrb[0].mxu0 %v1437
  %v1537 = vpop.f32.mrb[0].mxu0
  %v1538 = vadd.f32 0.0, %v1537
  %v1539 = vpop.f32.mrb[0].mxu0
  %v1540 = vpop.f32.mrb[0].mxu0
  %v1541 = vadd.f32 0.0, %v1540
  %v1542 = vpop.f32.mrb[0].mxu0
  %1543 = vdwg.mxu0
  %v1544 = vadd.f32 %v1381, %v1538
  %v1545 = vadd.f32 %v1382, %v1541
  %v1546 = vmax.f32 %v1544, 0.0
  %v1547 = vmax.f32 %v1545, 0.0
  %v1548 = vsel %vm20, 1.0, %v1546
  %v1549 = vsel %vm20, 1.0, %v1547
  %v1550 = vpack.c.bf16 %v1549, %v1548
  %v1551 = vld [vmem:[%s3] sm:$0xff]
  %v1552 = vld [vmem:[%s3 + $0x8] sm:$0xf]
  %v1553 = vld [vmem:[%s3 + $0xc] sm:$0xff]
  %v1554 = vld [vmem:[%s3 + $0x14] sm:$0xf]
  %v1555 = vld [vmem:[%s3 + $0x18] sm:$0xff]
  %v1556 = vld [vmem:[%s3 + $0x20] sm:$0xf]
  %v1557 = vld [vmem:[%s3 + $0x24] sm:$0xff]
  %v1558 = vld [vmem:[%s3 + $0x2c] sm:$0xf]
  %v1559 = vld [vmem:[%s3 + $0x30] sm:$0xff]
  %v1560 = vld [vmem:[%s3 + $0x38] sm:$0xf]
  %v1561 = vld [vmem:[%s3 + $0x3c] sm:$0xff]
  %v1562 = vld [vmem:[%s3 + $0x44] sm:$0xf]
  %v1563 = vld [vmem:[%s3 + $0x48] sm:$0xff]
  %v1564 = vld [vmem:[%s3 + $0x50] sm:$0xf]
  %v1565 = vld [vmem:[%s3 + $0x54] sm:$0xff]
  %v1566 = vld [vmem:[%s3 + $0x5c] sm:$0xf]
  %v1567 = vld [vmem:[%s3 + $0x60] sm:$0xff]
  %v1568 = vld [vmem:[%s3 + $0x68] sm:$0xf]
  %v1569 = vld [vmem:[%s3 + $0x6c] sm:$0xff]
  %v1570 = vld [vmem:[%s3 + $0x74] sm:$0xf]
  %v1571 = vld [vmem:[%s3 + $0x78] sm:$0xff]
  %v1572 = vld [vmem:[%s3 + $0x80] sm:$0xf]
  %v1573 = vld [vmem:[%s3 + $0x84] sm:$0xff]
  %v1574 = vld [vmem:[%s3 + $0x8c] sm:$0xf]
  %v1575 = vld [vmem:[%s3 + $0x90] sm:$0xff]
  %v1576 = vld [vmem:[%s3 + $0x98] sm:$0xf]
  %v1577 = vld [vmem:[%s3 + $0x9c] sm:$0xff]
  %v1578 = vld [vmem:[%s3 + $0xa4] sm:$0xf]
  %v1579 = vld [vmem:[%s3 + $0xa8] sm:$0xff]
  %v1580 = vld [vmem:[%s3 + $0xb0] sm:$0xf]
  %v1581 = vld [vmem:[%s3 + $0xb4] sm:$0xff]
  %v1582 = vld [vmem:[%s3 + $0xbc] sm:$0xf]
  %v1615 = vunpack.c.l.b16 %v1551
  %v1616 = vunpack.c.h.b16 %v1551
  %v1617 = vunpack.c.l.b16 %v1552
  %v1618 = vunpack.c.l.b16 %v1553
  %v1619 = vunpack.c.h.b16 %v1553
  %v1620 = vunpack.c.l.b16 %v1554
  %v1621 = vunpack.c.l.b16 %v1555
  %v1622 = vunpack.c.h.b16 %v1555
  %v1623 = vunpack.c.l.b16 %v1556
  %v1624 = vunpack.c.l.b16 %v1557
  %v1625 = vunpack.c.h.b16 %v1557
  %v1626 = vunpack.c.l.b16 %v1558
  %v1627 = vunpack.c.l.b16 %v1559
  %v1628 = vunpack.c.h.b16 %v1559
  %v1629 = vunpack.c.l.b16 %v1560
  %v1630 = vunpack.c.l.b16 %v1561
  %v1631 = vunpack.c.h.b16 %v1561
  %v1632 = vunpack.c.l.b16 %v1562
  %v1633 = vunpack.c.l.b16 %v1563
  %v1634 = vunpack.c.h.b16 %v1563
  %v1635 = vunpack.c.l.b16 %v1564
  %v1636 = vunpack.c.l.b16 %v1565
  %v1637 = vunpack.c.h.b16 %v1565
  %v1638 = vunpack.c.l.b16 %v1566
  %v1639 = vunpack.c.l.b16 %v1567
  %v1640 = vunpack.c.h.b16 %v1567
  %v1641 = vunpack.c.l.b16 %v1568
  %v1642 = vunpack.c.l.b16 %v1569
  %v1643 = vunpack.c.h.b16 %v1569
  %v1644 = vunpack.c.l.b16 %v1570
  %v1645 = vunpack.c.l.b16 %v1571
  %v1646 = vunpack.c.h.b16 %v1571
  %v1647 = vunpack.c.l.b16 %v1572
  %v1648 = vunpack.c.l.b16 %v1573
  %v1649 = vunpack.c.h.b16 %v1573
  %v1650 = vunpack.c.l.b16 %v1574
  %v1651 = vunpack.c.l.b16 %v1575
  %v1652 = vunpack.c.h.b16 %v1575
  %v1653 = vunpack.c.l.b16 %v1576
  %v1654 = vunpack.c.l.b16 %v1577
  %v1655 = vunpack.c.h.b16 %v1577
  %v1656 = vunpack.c.l.b16 %v1578
  %v1657 = vunpack.c.l.b16 %v1579
  %v1658 = vunpack.c.h.b16 %v1579
  %v1659 = vunpack.c.l.b16 %v1580
  %v1660 = vunpack.c.l.b16 %v1581
  %v1661 = vunpack.c.h.b16 %v1581
  %v1662 = vunpack.c.l.b16 %v1582
  %v1663 = vpack.c.b16 %v1618, %v1615
  %v1664 = vpack.c.b16 %v1619, %v1616
  %v1665 = vpack.c.b16 %v1620, %v1617
  %v1666 = vpack.c.b16 %v1624, %v1621
  %v1667 = vpack.c.b16 %v1625, %v1622
  %v1668 = vpack.c.b16 %v1626, %v1623
  %v1669 = vpack.c.b16 %v1630, %v1627
  %v1670 = vpack.c.b16 %v1631, %v1628
  %v1671 = vpack.c.b16 %v1632, %v1629
  %v1672 = vpack.c.b16 %v1636, %v1633
  %v1673 = vpack.c.b16 %v1637, %v1634
  %v1674 = vpack.c.b16 %v1638, %v1635
  %v1675 = vpack.c.b16 %v1642, %v1639
  %v1676 = vpack.c.b16 %v1643, %v1640
  %v1677 = vpack.c.b16 %v1644, %v1641
  %v1678 = vpack.c.b16 %v1648, %v1645
  %v1679 = vpack.c.b16 %v1649, %v1646
  %v1680 = vpack.c.b16 %v1650, %v1647
  %v1681 = vpack.c.b16 %v1654, %v1651
  %v1682 = vpack.c.b16 %v1655, %v1652
  %v1683 = vpack.c.b16 %v1656, %v1653
  %v1684 = vpack.c.b16 %v1660, %v1657
  %v1685 = vpack.c.b16 %v1661, %v1658
  %v1686 = vpack.c.b16 %v1662, %v1659
  %1711 = vmatprep.subr.bf16.mxu0 %v1664
  %1712 = vmatpush1.bf16.msra.mxu0 %v1663
  %1713 = vmatprep.subr.bf16.mxu0 %v1667
  %1714 = vmatpush1.bf16.msra.mxu0 %v1666
  %1715 = vmatprep.subr.bf16.mxu0 %v1670
  %1716 = vmatpush1.bf16.msra.mxu0 %v1669
  %1717 = vmatprep.subr.bf16.mxu0 %v1673
  %1718 = vmatpush1.bf16.msra.mxu0 %v1672
  %1719 = vmatprep.subr.bf16.mxu0 %v1676
  %1720 = vmatpush1.bf16.msra.mxu0 %v1675
  %1721 = vmatprep.subr.bf16.mxu0 %v1679
  %1722 = vmatpush1.bf16.msra.mxu0 %v1678
  %1723 = vmatprep.subr.bf16.mxu0 %v1682
  %1724 = vmatpush1.bf16.msra.mxu0 %v1681
  %1725 = vmatprep.subr.bf16.mxu0 %v1685
  %1726 = vmatpush1.bf16.msra.mxu0 %v1684
  %1727 = vmatprep.subr.bf16.mxu0 0
  %1728 = vmatpush1.bf16.msra.mxu0 0
  %1729 = vmatprep.subr.bf16.mxu0 0
  %1730 = vmatpush1.bf16.msra.mxu0 0
  %1731 = vmatprep.subr.bf16.mxu0 0
  %1732 = vmatpush1.bf16.msra.mxu0 0
  %1733 = vmatprep.subr.bf16.mxu0 0
  %1734 = vmatpush1.bf16.msra.mxu0 0
  %1735 = vmatprep.subr.bf16.mxu0 0
  %1736 = vmatpush1.bf16.msra.mxu0 0
  %1737 = vmatprep.subr.bf16.mxu0 0
  %1738 = vmatpush1.bf16.msra.mxu0 0
  %1739 = vmatprep.subr.bf16.mxu0 0
  %1740 = vmatpush1.bf16.msra.mxu0 0
  %1741 = vmatprep.subr.bf16.mxu0 0
  %1742 = vmatpush1.bf16.msra.mxu0 0
  %1743 = vmatprep.mubr.bf16.mxu0 0
  %1744 = vmatmul.mubr.bf16.gmra.mrb[0].mxu0 %v1550
  %v1745 = vpop.f32.mrb[0].mxu0
  %v1746 = vadd.f32 0.0, %v1745
  %v1747 = vpop.f32.mrb[0].mxu0
  %v1748 = vadd.f32 0.0, %v1747
  %v1749 = vpop.f32.mrb[0].mxu0
  %v1750 = vadd.f32 0.0, %v1749
  %v1751 = vpop.f32.mrb[0].mxu0
  %v1752 = vadd.f32 0.0, %v1751
  %1753 = vdwg.mxu0
  %1754 = vmatprep.subr.bf16.mxu0 0
  %1755 = vmatpush1.bf16.msra.mxu0 %v1665
  %1756 = vmatprep.subr.bf16.mxu0 0
  %1757 = vmatpush1.bf16.msra.mxu0 %v1668
  %1758 = vmatprep.subr.bf16.mxu0 0
  %1759 = vmatpush1.bf16.msra.mxu0 %v1671
  %1760 = vmatprep.subr.bf16.mxu0 0
  %1761 = vmatpush1.bf16.msra.mxu0 %v1674
  %1762 = vmatprep.subr.bf16.mxu0 0
  %1763 = vmatpush1.bf16.msra.mxu0 %v1677
  %1764 = vmatprep.subr.bf16.mxu0 0
  %1765 = vmatpush1.bf16.msra.mxu0 %v1680
  %1766 = vmatprep.subr.bf16.mxu0 0
  %1767 = vmatpush1.bf16.msra.mxu0 %v1683
  %1768 = vmatprep.subr.bf16.mxu0 0
  %1769 = vmatpush1.bf16.msra.mxu0 %v1686
  %1770 = vmatprep.subr.bf16.mxu0 0
  %1771 = vmatpush1.bf16.msra.mxu0 0
  %1772 = vmatprep.subr.bf16.mxu0 0
  %1773 = vmatpush1.bf16.msra.mxu0 0
  %1774 = vmatprep.subr.bf16.mxu0 0
  %1775 = vmatpush1.bf16.msra.mxu0 0
  %1776 = vmatprep.subr.bf16.mxu0 0
  %1777 = vmatpush1.bf16.msra.mxu0 0
  %1778 = vmatprep.subr.bf16.mxu0 0
  %1779 = vmatpush1.bf16.msra.mxu0 0
  %1780 = vmatprep.subr.bf16.mxu0 0
  %1781 = vmatpush1.bf16.msra.mxu0 0
  %1782 = vmatprep.subr.bf16.mxu0 0
  %1783 = vmatpush1.bf16.msra.mxu0 0
  %1784 = vmatprep.subr.bf16.mxu0 0
  %1785 = vmatpush1.bf16.msra.mxu0 0
  %1786 = vmatprep.mubr.bf16.mxu0 0
  %1787 = vmatmul.mubr.bf16.gmra.mrb[0].mxu0 %v1550
  %v1788 = vpop.f32.mrb[0].mxu0
  %v1789 = vadd.f32 0.0, %v1788
  %v1790 = vpop.f32.mrb[0].mxu0
  %v1791 = vpop.f32.mrb[0].mxu0
  %v1792 = vadd.f32 0.0, %v1791
  %v1793 = vpop.f32.mrb[0].mxu0
  %1794 = vdwg.mxu0
  %v1795 = vand.u32 2147483647, %v1746
  %v1796 = vand.u32 2147483647, %v1748
  %v1797 = vand.u32 2147483647, %v1789
  %v1798 = vand.u32 2147483647, %v1750
  %v1799 = vand.u32 2147483647, %v1752
  %v1800 = vand.u32 2147483647, %v1792
  %v1801 = vsub.f32 0.0, %v1795
  %v1802 = vsub.f32 0.0, %v1796
  %v1803 = vsub.f32 0.0, %v1797
  %v1804 = vsub.f32 0.0, %v1798
  %v1805 = vsub.f32 0.0, %v1799
  %v1806 = vsub.f32 0.0, %v1800
  %v1807 = vmul.f32 %v1801, 1.442695
  %v1808 = vpow.pop %v1807
  %v1809 = vmul.f32 %v1802, 1.442695
  %v1810 = vpow.pop %v1809
  %v1811 = vmul.f32 %v1803, 1.442695
  %v1812 = vpow.pop %v1811
  %v1813 = vmul.f32 %v1804, 1.442695
  %v1814 = vpow.pop %v1813
  %v1815 = vmul.f32 %v1805, 1.442695
  %v1816 = vpow.pop %v1815
  %v1817 = vmul.f32 %v1806, 1.442695
  %v1818 = vpow.pop %v1817
  %v1819 = vadd.f32 %v1808, 1.0
  %v1820 = vadd.f32 %v1810, 1.0
  %v1821 = vadd.f32 %v1812, 1.0
  %v1822 = vadd.f32 %v1814, 1.0
  %v1823 = vadd.f32 %v1816, 1.0
  %v1824 = vadd.f32 %v1818, 1.0
  %v1825 = vrcp.pop %v1819
  %v1826 = vmul.f32 1.0, %v1825
  %v1827 = vrcp.pop %v1820
  %v1828 = vmul.f32 1.0, %v1827
  %v1829 = vrcp.pop %v1821
  %v1830 = vmul.f32 1.0, %v1829
  %v1831 = vrcp.pop %v1822
  %v1832 = vmul.f32 1.0, %v1831
  %v1833 = vrcp.pop %v1823
  %v1834 = vmul.f32 1.0, %v1833
  %v1835 = vrcp.pop %v1824
  %v1836 = vmul.f32 1.0, %v1835
  %vm1837 = vcmp.ge.f32.partialorder %v1746, 0.0
  %vm1838 = vcmp.ge.f32.partialorder %v1748, 0.0
  %vm1839 = vcmp.ge.f32.partialorder %v1789, 0.0
  %vm1840 = vcmp.ge.f32.partialorder %v1750, 0.0
  %vm1841 = vcmp.ge.f32.partialorder %v1752, 0.0
  %vm1842 = vcmp.ge.f32.partialorder %v1792, 0.0
  %v1843 = vmul.f32 %v1808, %v1826
  %v1844 = vmul.f32 %v1810, %v1828
  %v1845 = vmul.f32 %v1812, %v1830
  %v1846 = vmul.f32 %v1814, %v1832
  %v1847 = vmul.f32 %v1816, %v1834
  %v1848 = vmul.f32 %v1818, %v1836
  %v1849 = vsel %vm1837, %v1826, %v1843
  %v1850 = vsel %vm1838, %v1828, %v1844
  %v1851 = vsel %vm1839, %v1830, %v1845
  %v1852 = vsel %vm1840, %v1832, %v1846
  %v1853 = vsel %vm1841, %v1834, %v1847
  %v1854 = vsel %vm1842, %v1836, %v1848
  %1855 = vst [vmem:[%s4] sm:$0xff] %v1849
  %1856 = vst [vmem:[%s4 + $0x8] sm:$0xff] %v1850
  %1857 = vst [vmem:[%s4 + $0x10] sm:$0xff] %v1851
  %1858 = vst [vmem:[%s4 + $0x18] sm:$0xff] %v1852
  %1859 = vst [vmem:[%s4 + $0x20] sm:$0xff] %v1853
  %1860 = vst [vmem:[%s4 + $0x28] sm:$0xff] %v1854
  // Predicated region
  $region18: #{attention_module_w.1} parent=0 // pred_check
    _
  $region19: #{attention_module_w.1} parent=0 // pred_check_branch
    %1862 = sbr.rel (0) target = $region21
  $region20: #{attention_module_w.1} parent=0 // pred_region
    _
  $region21: #{attention_module_w.1} parent=0 // pred_fallthru
    _
  // Predicated region
  $region22: #{attention_module_w.1} parent=0 // pred_check
    _
  $region23: #{attention_module_w.1} parent=0 // pred_check_branch
    %1864 = sbr.rel (0) target = $region25
  $region24: #{attention_module_w.1} parent=0 // pred_region
    _
  $region25: #{attention_module_w.1} parent=0 // pred_fallthru
    _

</llo_original>
